<compile_context>
chip_gen: v7x
topology: tpu7x:2x2x1
jax: 0.10.0
libtpu: 0.0.40
codegen_flags: <defaults>
</compile_context>

<pallas_src>
import functools

import jax
import jax.numpy as jnp
from jax.experimental import pallas as pl
from jax.experimental.pallas import tpu as pltpu


def _layer_norm(v, w, b, eps=1e-5):
    mu = jnp.mean(v, axis=-1, keepdims=True)
    var = jnp.mean(jnp.square(v - mu), axis=-1, keepdims=True)
    return (v - mu) * jax.lax.rsqrt(var + eps) * w + b


def _encoder_kernel(x_ref, mask_ref,
                    ln1w_ref, ln1b_ref, wqkv_ref, bqkv_ref, wout_ref, bout_ref,
                    ln2w_ref, ln2b_ref, w1_ref, b1_ref, w2_ref, b2_ref,
                    o_ref, *, batch, seq, nhead, head_dim, activation):
    """One grid step == one encoder layer.

    The (B*S, D) activation slab lives in the revisited output VMEM block across
    the whole layer grid (output BlockSpec index is constant), so intermediate
    layer activations never touch HBM.
    """
    d_model = nhead * head_dim
    layer = pl.program_id(0)

    @pl.when(layer == 0)
    def _():
        o_ref[...] = x_ref[...]

    x = o_ref[...]                      # (B*S, D) f32, VMEM-resident activation
    add_mask = mask_ref[...]            # (B, S) additive key-padding mask (0 / -inf)

    # --- self-attention branch (pre-LN) ---
    h = _layer_norm(x, ln1w_ref[0], ln1b_ref[0])
    qkv = jnp.dot(h.astype(jnp.bfloat16), wqkv_ref[0],
                  preferred_element_type=jnp.float32) + bqkv_ref[0]    # (B*S, 3D) f32
    qkv3 = qkv.reshape(batch, seq, 3 * d_model).astype(jnp.bfloat16)   # (B, S, 3D)

    scale = 1.0 / (head_dim ** 0.5)
    head_outs = []
    for hh in range(nhead):             # static loop over heads, batched over B
        q = qkv3[:, :, hh * head_dim:(hh + 1) * head_dim]
        k = qkv3[:, :, d_model + hh * head_dim:d_model + (hh + 1) * head_dim]
        v = qkv3[:, :, 2 * d_model + hh * head_dim:2 * d_model + (hh + 1) * head_dim]
        s = jnp.einsum('bqd,bkd->bqk', q, k,
                       preferred_element_type=jnp.float32) * scale
        s = s + add_mask[:, None, :]                       # broadcast over query rows
        m = jnp.max(s, axis=-1, keepdims=True)
        e = jnp.exp(s - m)
        p = e * pl.reciprocal(jnp.sum(e, axis=-1, keepdims=True), approx=True)
        head_outs.append(jnp.einsum('bqk,bkd->bqd', p.astype(jnp.bfloat16), v,
                                    preferred_element_type=jnp.float32))
    attn = jnp.concatenate(head_outs, axis=-1).reshape(batch * seq, d_model)
    attn = jnp.dot(attn.astype(jnp.bfloat16), wout_ref[0],
                   preferred_element_type=jnp.float32) + bout_ref[0]
    x1 = x + attn

    # --- feed-forward branch (pre-LN) ---
    h2 = _layer_norm(x1, ln2w_ref[0], ln2b_ref[0])
    ff = jnp.dot(h2.astype(jnp.bfloat16), w1_ref[0],
                 preferred_element_type=jnp.float32) + b1_ref[0]
    if activation == "relu":
        ff = jnp.maximum(ff, 0.0)
    else:  # "gelu" (PyTorch default F.gelu is exact erf-based)
        ff = jax.nn.gelu(ff, approximate=False)
    ff = jnp.dot(ff.astype(jnp.bfloat16), w2_ref[0],
                 preferred_element_type=jnp.float32) + b2_ref[0]

    o_ref[...] = x1 + ff


_PARAM_ORDER = ('ln1_w', 'ln1_b', 'wqkv_t', 'bqkv', 'wout_t', 'bout',
                'ln2_w', 'ln2_b', 'w1_t', 'b1', 'w2_t', 'b2')


def _encoder_forward(x_flat, add_mask, params, *, batch, seq, nhead, activation):
    BS, D = x_flat.shape
    num_layers = params['wqkv_t'].shape[0]
    head_dim = D // nhead

    kernel = functools.partial(_encoder_kernel, batch=batch, seq=seq, nhead=nhead,
                               head_dim=head_dim, activation=activation)

    weights = [params[k] for k in _PARAM_ORDER]

    def layer_spec(a):
        # stream one layer's weights per grid step (auto double-buffered by Pallas)
        return pl.BlockSpec((1,) + a.shape[1:], lambda l: (l, 0, 0))

    in_specs = ([pl.BlockSpec((BS, D), lambda l: (0, 0)),
                 pl.BlockSpec(add_mask.shape, lambda l: (0, 0))]
                + [layer_spec(w) for w in weights])

    return pl.pallas_call(
        kernel,
        out_shape=jax.ShapeDtypeStruct((BS, D), jnp.float32),
        grid=(num_layers,),
        in_specs=in_specs,
        out_specs=pl.BlockSpec((BS, D), lambda l: (0, 0)),
        compiler_params=pltpu.CompilerParams(
            dimension_semantics=("arbitrary",),      # layers are strictly sequential
            vmem_limit_bytes=32 * 1024 * 1024),
    )(x_flat, add_mask, *weights)


class Encoder:
    """JAX/Pallas equivalent of the PyTorch Encoder module (inference)."""

    def __init__(self, d_model, nhead, d_ff, dropout, activation, num_layers, key):
        # TODO(synk): dropout is a no-op here (eval-mode semantics); PyTorch training
        # dropout has no deterministic Pallas equivalent without matching RNG streams.
        del dropout
        self.d_model = d_model
        self.nhead = nhead
        self.d_ff = d_ff
        self.activation = activation
        self.num_layers = num_layers

        scale = 0.02

        def init(k, shape):
            # weights stored pre-transposed (x @ W^T -> x @ w_t) and in bf16:
            # MXU operands are bf16, accumulation stays f32 inside the kernel.
            return (scale * jax.random.normal(k, shape)).astype(jnp.bfloat16)

        wqkv, wout, w1, w2 = [], [], [], []
        for l in range(num_layers):
            k = jax.random.fold_in(key, l)
            k1, k2, k3, k4 = jax.random.split(k, 4)
            wqkv.append(init(k1, (d_model, 3 * d_model)))
            wout.append(init(k2, (d_model, d_model)))
            w1.append(init(k3, (d_model, d_ff)))
            w2.append(init(k4, (d_ff, d_model)))

        L = num_layers
        self.params = {
            'ln1_w': jnp.ones((L, 1, d_model), jnp.float32),
            'ln1_b': jnp.zeros((L, 1, d_model), jnp.float32),
            'wqkv_t': jnp.stack(wqkv),                        # (L, D, 3D) bf16
            'bqkv': jnp.zeros((L, 1, 3 * d_model), jnp.float32),
            'wout_t': jnp.stack(wout),                        # (L, D, D) bf16
            'bout': jnp.zeros((L, 1, d_model), jnp.float32),
            'ln2_w': jnp.ones((L, 1, d_model), jnp.float32),
            'ln2_b': jnp.zeros((L, 1, d_model), jnp.float32),
            'w1_t': jnp.stack(w1),                            # (L, D, F) bf16
            'b1': jnp.zeros((L, 1, d_ff), jnp.float32),
            'w2_t': jnp.stack(w2),                            # (L, F, D) bf16
            'b2': jnp.zeros((L, 1, d_model), jnp.float32),
        }

    def __call__(self, remain_dict, padding_mask_dict, temporal_cols):
        # additive key-padding mask (1 -> 0.0, else -> -inf), exactly as in torch.
        # NOTE: a fully-masked row yields NaN (same failure mode as PyTorch).
        pm = jnp.concatenate(
            [padding_mask_dict[f'{c}_remain_padding_mask'] for c in temporal_cols],
            axis=1)
        add_mask = jnp.where(pm == 1, 0.0, -jnp.inf).astype(jnp.float32)    # (B, S)

        key_cols = list(remain_dict.keys())
        x = jnp.concatenate(list(remain_dict.values()), axis=1).astype(jnp.float32)
        B, S, D = x.shape
        x_flat = x.reshape(B * S, D)    # collapse batch into matmul rows (wrapper side)

        out = _encoder_forward(x_flat, add_mask, self.params,
                               batch=B, seq=S, nhead=self.nhead,
                               activation=self.activation)
        return out.reshape(B, S, D), key_cols


if __name__ == "__main__":
    key = jax.random.PRNGKey(0)
    kp, ka, kb = jax.random.split(key, 3)

    B, d_model, nhead, d_ff, num_layers = 2, 32, 4, 64, 2
    temporal_cols = ["a", "b"]
    len_a, len_b = 5, 3                                      # total S = 8

    remain_dict = {
        "a": jax.random.normal(ka, (B, len_a, d_model), jnp.float32),
        "b": jax.random.normal(kb, (B, len_b, d_model), jnp.float32),
    }
    padding_mask_dict = {
        "a_remain_padding_mask": jnp.array([[1, 1, 1, 1, 0],
                                            [1, 1, 1, 0, 0]], jnp.int32),
        "b_remain_padding_mask": jnp.array([[1, 1, 0],
                                            [1, 1, 1]], jnp.int32),
    }

    enc = Encoder(d_model=d_model, nhead=nhead, d_ff=d_ff, dropout=0.0,
                  activation="relu", num_layers=num_layers, key=kp)

    encoding, key_cols = enc(remain_dict, padding_mask_dict, temporal_cols)
    encoding = jax.block_until_ready(encoding)

    assert encoding.shape == (B, len_a + len_b, d_model)
    assert key_cols == ["a", "b"]
    assert bool(jnp.all(jnp.isfinite(encoding)))
    print("KERNEL_OK")
</pallas_src>

<mosaic_0001>
module attributes {stable_mosaic.version = 11 : i64} {
  func.func @_encoder_kernel(%arg0: i32, %arg1: memref<16x32xf32, #tpu.memory_space<vmem>>, %arg2: memref<2x8xf32, #tpu.memory_space<vmem>>, %arg3: memref<1x1x32xf32, #tpu.memory_space<vmem>>, %arg4: memref<1x1x32xf32, #tpu.memory_space<vmem>>, %arg5: memref<1x32x96xbf16, #tpu.memory_space<vmem>>, %arg6: memref<1x1x96xf32, #tpu.memory_space<vmem>>, %arg7: memref<1x32x32xbf16, #tpu.memory_space<vmem>>, %arg8: memref<1x1x32xf32, #tpu.memory_space<vmem>>, %arg9: memref<1x1x32xf32, #tpu.memory_space<vmem>>, %arg10: memref<1x1x32xf32, #tpu.memory_space<vmem>>, %arg11: memref<1x32x64xbf16, #tpu.memory_space<vmem>>, %arg12: memref<1x1x64xf32, #tpu.memory_space<vmem>>, %arg13: memref<1x64x32xbf16, #tpu.memory_space<vmem>>, %arg14: memref<1x1x32xf32, #tpu.memory_space<vmem>>, %arg15: memref<16x32xf32, #tpu.memory_space<vmem>>) attributes {dimension_semantics = [#tpu.dimension_semantics<arbitrary>], iteration_bounds = array<i64: 2>, scalar_prefetch = 0 : i64, scratch_operands = 0 : i64, tpu.core_type = #tpu.core_type<tc>, window_params = [{pipeline_mode = #tpu.pipeline_mode<synchronous>, transform_indices = @transform_0, window_bounds = array<i64: 16, 32>}, {pipeline_mode = #tpu.pipeline_mode<synchronous>, transform_indices = @transform_1, window_bounds = array<i64: 2, 8>}, {transform_indices = @transform_2, window_bounds = array<i64: 1, 1, 32>}, {transform_indices = @transform_3, window_bounds = array<i64: 1, 1, 32>}, {transform_indices = @transform_4, window_bounds = array<i64: 1, 32, 96>}, {transform_indices = @transform_5, window_bounds = array<i64: 1, 1, 96>}, {transform_indices = @transform_6, window_bounds = array<i64: 1, 32, 32>}, {transform_indices = @transform_7, window_bounds = array<i64: 1, 1, 32>}, {transform_indices = @transform_8, window_bounds = array<i64: 1, 1, 32>}, {transform_indices = @transform_9, window_bounds = array<i64: 1, 1, 32>}, {transform_indices = @transform_10, window_bounds = array<i64: 1, 32, 64>}, {transform_indices = @transform_11, window_bounds = array<i64: 1, 1, 64>}, {transform_indices = @transform_12, window_bounds = array<i64: 1, 64, 32>}, {transform_indices = @transform_13, window_bounds = array<i64: 1, 1, 32>}, {pipeline_mode = #tpu.pipeline_mode<synchronous>, transform_indices = @transform_14, window_bounds = array<i64: 16, 32>}]} {
    %c0_i32 = arith.constant 0 : i32
    %0 = arith.cmpi eq, %arg0, %c0_i32 : i32
    %1 = arith.extui %0 : i1 to i32
    %c0_i32_0 = arith.constant 0 : i32
    %2 = arith.cmpi ne, %1, %c0_i32_0 : i32
    scf.if %2 {
      %c0_76 = arith.constant 0 : index
      %c0_77 = arith.constant 0 : index
      %182 = vector.load %arg1[%c0_76, %c0_77] : memref<16x32xf32, #tpu.memory_space<vmem>>, vector<16x32xf32>
      %c0_78 = arith.constant 0 : index
      %c0_79 = arith.constant 0 : index
      %183 = vector.load %arg15[%c0_78, %c0_79] : memref<16x32xf32, #tpu.memory_space<vmem>>, vector<16x32xf32>
      tpu.vector_store %arg15[%c0_78, %c0_79], %182 {strides = array<i32>} : memref<16x32xf32, #tpu.memory_space<vmem>>, vector<16x32xf32>,
    } else {
    }
    %c0 = arith.constant 0 : index
    %c0_1 = arith.constant 0 : index
    %3 = vector.load %arg15[%c0, %c0_1] : memref<16x32xf32, #tpu.memory_space<vmem>>, vector<16x32xf32>
    %c0_2 = arith.constant 0 : index
    %c0_3 = arith.constant 0 : index
    %4 = vector.load %arg2[%c0_2, %c0_3] : memref<2x8xf32, #tpu.memory_space<vmem>>, vector<2x8xf32>
    %c0_4 = arith.constant 0 : index
    %c0_5 = arith.constant 0 : index
    %c0_6 = arith.constant 0 : index
    %5 = vector.load %arg3[%c0_4, %c0_5, %c0_6] : memref<1x1x32xf32, #tpu.memory_space<vmem>>, vector<1x1x32xf32>
    %6 = vector.shape_cast %5 : vector<1x1x32xf32> to vector<1x32xf32>
    %c0_7 = arith.constant 0 : index
    %c0_8 = arith.constant 0 : index
    %c0_9 = arith.constant 0 : index
    %7 = vector.load %arg4[%c0_7, %c0_8, %c0_9] : memref<1x1x32xf32, #tpu.memory_space<vmem>>, vector<1x1x32xf32>
    %8 = vector.shape_cast %7 : vector<1x1x32xf32> to vector<1x32xf32>
    %cst = arith.constant dense<0.000000e+00> : vector<16xf32>
    %9 = vector.multi_reduction <add>, %3, %cst [1] : vector<16x32xf32> to vector<16xf32>
    %10 = vector.shape_cast %9 : vector<16xf32> to vector<16x1xf32>
    %cst_10 = arith.constant 3.200000e+01 : f32
    %11 = vector.broadcast %cst_10 : f32 to vector<16x1xf32>
    %12 = arith.divf %10, %11 : vector<16x1xf32>
    %13 = vector.broadcast %12 : vector<16x1xf32> to vector<16x32xf32>
    %14 = arith.subf %3, %13 : vector<16x32xf32>
    %15 = arith.mulf %14, %14 : vector<16x32xf32>
    %cst_11 = arith.constant dense<0.000000e+00> : vector<16xf32>
    %16 = vector.multi_reduction <add>, %15, %cst_11 [1] : vector<16x32xf32> to vector<16xf32>
    %17 = vector.shape_cast %16 : vector<16xf32> to vector<16x1xf32>
    %cst_12 = arith.constant 3.200000e+01 : f32
    %18 = vector.broadcast %cst_12 : f32 to vector<16x1xf32>
    %19 = arith.divf %17, %18 : vector<16x1xf32>
    %20 = vector.broadcast %12 : vector<16x1xf32> to vector<16x32xf32>
    %21 = arith.subf %3, %20 : vector<16x32xf32>
    %cst_13 = arith.constant 9.99999974E-6 : f32
    %22 = vector.broadcast %cst_13 : f32 to vector<16x1xf32>
    %23 = arith.addf %19, %22 : vector<16x1xf32>
    %24 = math.rsqrt %23 : vector<16x1xf32>
    %25 = vector.broadcast %24 : vector<16x1xf32> to vector<16x32xf32>
    %26 = arith.mulf %21, %25 : vector<16x32xf32>
    %27 = vector.broadcast %6 : vector<1x32xf32> to vector<16x32xf32>
    %28 = arith.mulf %26, %27 : vector<16x32xf32>
    %29 = vector.broadcast %8 : vector<1x32xf32> to vector<16x32xf32>
    %30 = arith.addf %28, %29 : vector<16x32xf32>
    %31 = arith.truncf %30 : vector<16x32xf32> to vector<16x32xbf16>
    %c0_14 = arith.constant 0 : index
    %c0_15 = arith.constant 0 : index
    %c0_16 = arith.constant 0 : index
    %32 = vector.load %arg5[%c0_14, %c0_15, %c0_16] : memref<1x32x96xbf16, #tpu.memory_space<vmem>>, vector<1x32x96xbf16>
    %33 = vector.shape_cast %32 : vector<1x32x96xbf16> to vector<32x96xbf16>
    %cst_17 = arith.constant dense<0.000000e+00> : vector<16x96xf32>
    %34 = tpu.matmul %31, %33, %cst_17 {dimension_numbers = #tpu.dot_dimension_numbers<[1], [0], [0], [1], [0, 0, 1, 1], [], []>} : vector<16x32xbf16>, vector<32x96xbf16>, vector<16x96xf32> -> vector<16x96xf32>
    %c0_18 = arith.constant 0 : index
    %c0_19 = arith.constant 0 : index
    %c0_20 = arith.constant 0 : index
    %35 = vector.load %arg6[%c0_18, %c0_19, %c0_20] : memref<1x1x96xf32, #tpu.memory_space<vmem>>, vector<1x1x96xf32>
    %36 = vector.shape_cast %35 : vector<1x1x96xf32> to vector<1x96xf32>
    %37 = vector.broadcast %36 : vector<1x96xf32> to vector<16x96xf32>
    %38 = arith.addf %34, %37 : vector<16x96xf32>
    %39 = vector.shape_cast %38 : vector<16x96xf32> to vector<2x8x96xf32>
    %40 = arith.truncf %39 : vector<2x8x96xf32> to vector<2x8x96xbf16>
    %41 = vector.extract_strided_slice %40 {offsets = [0, 0, 0], sizes = [2, 8, 8], strides = [1, 1, 1]} : vector<2x8x96xbf16> to vector<2x8x8xbf16>
    %42 = vector.extract_strided_slice %40 {offsets = [0, 0, 32], sizes = [2, 8, 8], strides = [1, 1, 1]} : vector<2x8x96xbf16> to vector<2x8x8xbf16>
    %43 = vector.extract_strided_slice %40 {offsets = [0, 0, 64], sizes = [2, 8, 8], strides = [1, 1, 1]} : vector<2x8x96xbf16> to vector<2x8x8xbf16>
    "tpu.trace_start"() <{level = 10 : i32, message = "bqd,bkd->bqk"}> : () -> ()
    %cst_21 = arith.constant dense<0.000000e+00> : vector<2x8x8xf32>
    %44 = tpu.matmul %41, %42, %cst_21 {dimension_numbers = #tpu.dot_dimension_numbers<[2], [2], [1], [1], [0, 0, 0, 1, 1, 1], [0], [0]>} : vector<2x8x8xbf16>, vector<2x8x8xbf16>, vector<2x8x8xf32> -> vector<2x8x8xf32>
    "tpu.trace_stop"() : () -> ()
    %cst_22 = arith.constant 0.353553385 : f32
    %45 = vector.broadcast %cst_22 : f32 to vector<2x8x8xf32>
    %46 = arith.mulf %44, %45 : vector<2x8x8xf32>
    %47 = vector.shape_cast %4 : vector<2x8xf32> to vector<2x1x8xf32>
    %48 = vector.broadcast %47 : vector<2x1x8xf32> to vector<2x8x8xf32>
    %49 = arith.addf %46, %48 : vector<2x8x8xf32>
    %cst_23 = arith.constant dense<0xFF800000> : vector<2x8xf32>
    %50 = vector.multi_reduction <maximumf>, %49, %cst_23 [2] : vector<2x8x8xf32> to vector<2x8xf32>
    %51 = vector.shape_cast %50 : vector<2x8xf32> to vector<2x8x1xf32>
    %52 = vector.broadcast %51 : vector<2x8x1xf32> to vector<2x8x8xf32>
    %53 = arith.subf %49, %52 : vector<2x8x8xf32>
    %54 = math.exp %53 : vector<2x8x8xf32>
    %cst_24 = arith.constant dense<0.000000e+00> : vector<2x8xf32>
    %55 = vector.multi_reduction <add>, %54, %cst_24 [2] : vector<2x8x8xf32> to vector<2x8xf32>
    %56 = vector.shape_cast %55 : vector<2x8xf32> to vector<2x8x1xf32>
    %57 = tpu.reciprocal %56 {approx = true} : vector<2x8x1xf32> -> vector<2x8x1xf32>
    %58 = vector.broadcast %57 : vector<2x8x1xf32> to vector<2x8x8xf32>
    %59 = arith.mulf %54, %58 : vector<2x8x8xf32>
    %60 = arith.truncf %59 : vector<2x8x8xf32> to vector<2x8x8xbf16>
    "tpu.trace_start"() <{level = 10 : i32, message = "bqk,bkd->bqd"}> : () -> ()
    %cst_25 = arith.constant dense<0.000000e+00> : vector<2x8x8xf32>
    %61 = tpu.matmul %60, %43, %cst_25 {dimension_numbers = #tpu.dot_dimension_numbers<[2], [1], [1], [2], [0, 0, 0, 1, 1, 2], [0], [0]>} : vector<2x8x8xbf16>, vector<2x8x8xbf16>, vector<2x8x8xf32> -> vector<2x8x8xf32>
    "tpu.trace_stop"() : () -> ()
    %62 = vector.extract_strided_slice %40 {offsets = [0, 0, 8], sizes = [2, 8, 8], strides = [1, 1, 1]} : vector<2x8x96xbf16> to vector<2x8x8xbf16>
    %63 = vector.extract_strided_slice %40 {offsets = [0, 0, 40], sizes = [2, 8, 8], strides = [1, 1, 1]} : vector<2x8x96xbf16> to vector<2x8x8xbf16>
    %64 = vector.extract_strided_slice %40 {offsets = [0, 0, 72], sizes = [2, 8, 8], strides = [1, 1, 1]} : vector<2x8x96xbf16> to vector<2x8x8xbf16>
    "tpu.trace_start"() <{level = 10 : i32, message = "bqd,bkd->bqk"}> : () -> ()
    %cst_26 = arith.constant dense<0.000000e+00> : vector<2x8x8xf32>
    %65 = tpu.matmul %62, %63, %cst_26 {dimension_numbers = #tpu.dot_dimension_numbers<[2], [2], [1], [1], [0, 0, 0, 1, 1, 1], [0], [0]>} : vector<2x8x8xbf16>, vector<2x8x8xbf16>, vector<2x8x8xf32> -> vector<2x8x8xf32>
    "tpu.trace_stop"() : () -> ()
    %cst_27 = arith.constant 0.353553385 : f32
    %66 = vector.broadcast %cst_27 : f32 to vector<2x8x8xf32>
    %67 = arith.mulf %65, %66 : vector<2x8x8xf32>
    %68 = vector.shape_cast %4 : vector<2x8xf32> to vector<2x1x8xf32>
    %69 = vector.broadcast %68 : vector<2x1x8xf32> to vector<2x8x8xf32>
    %70 = arith.addf %67, %69 : vector<2x8x8xf32>
    %cst_28 = arith.constant dense<0xFF800000> : vector<2x8xf32>
    %71 = vector.multi_reduction <maximumf>, %70, %cst_28 [2] : vector<2x8x8xf32> to vector<2x8xf32>
    %72 = vector.shape_cast %71 : vector<2x8xf32> to vector<2x8x1xf32>
    %73 = vector.broadcast %72 : vector<2x8x1xf32> to vector<2x8x8xf32>
    %74 = arith.subf %70, %73 : vector<2x8x8xf32>
    %75 = math.exp %74 : vector<2x8x8xf32>
    %cst_29 = arith.constant dense<0.000000e+00> : vector<2x8xf32>
    %76 = vector.multi_reduction <add>, %75, %cst_29 [2] : vector<2x8x8xf32> to vector<2x8xf32>
    %77 = vector.shape_cast %76 : vector<2x8xf32> to vector<2x8x1xf32>
    %78 = tpu.reciprocal %77 {approx = true} : vector<2x8x1xf32> -> vector<2x8x1xf32>
    %79 = vector.broadcast %78 : vector<2x8x1xf32> to vector<2x8x8xf32>
    %80 = arith.mulf %75, %79 : vector<2x8x8xf32>
    %81 = arith.truncf %80 : vector<2x8x8xf32> to vector<2x8x8xbf16>
    "tpu.trace_start"() <{level = 10 : i32, message = "bqk,bkd->bqd"}> : () -> ()
    %cst_30 = arith.constant dense<0.000000e+00> : vector<2x8x8xf32>
    %82 = tpu.matmul %81, %64, %cst_30 {dimension_numbers = #tpu.dot_dimension_numbers<[2], [1], [1], [2], [0, 0, 0, 1, 1, 2], [0], [0]>} : vector<2x8x8xbf16>, vector<2x8x8xbf16>, vector<2x8x8xf32> -> vector<2x8x8xf32>
    "tpu.trace_stop"() : () -> ()
    %83 = vector.extract_strided_slice %40 {offsets = [0, 0, 16], sizes = [2, 8, 8], strides = [1, 1, 1]} : vector<2x8x96xbf16> to vector<2x8x8xbf16>
    %84 = vector.extract_strided_slice %40 {offsets = [0, 0, 48], sizes = [2, 8, 8], strides = [1, 1, 1]} : vector<2x8x96xbf16> to vector<2x8x8xbf16>
    %85 = vector.extract_strided_slice %40 {offsets = [0, 0, 80], sizes = [2, 8, 8], strides = [1, 1, 1]} : vector<2x8x96xbf16> to vector<2x8x8xbf16>
    "tpu.trace_start"() <{level = 10 : i32, message = "bqd,bkd->bqk"}> : () -> ()
    %cst_31 = arith.constant dense<0.000000e+00> : vector<2x8x8xf32>
    %86 = tpu.matmul %83, %84, %cst_31 {dimension_numbers = #tpu.dot_dimension_numbers<[2], [2], [1], [1], [0, 0, 0, 1, 1, 1], [0], [0]>} : vector<2x8x8xbf16>, vector<2x8x8xbf16>, vector<2x8x8xf32> -> vector<2x8x8xf32>
    "tpu.trace_stop"() : () -> ()
    %cst_32 = arith.constant 0.353553385 : f32
    %87 = vector.broadcast %cst_32 : f32 to vector<2x8x8xf32>
    %88 = arith.mulf %86, %87 : vector<2x8x8xf32>
    %89 = vector.shape_cast %4 : vector<2x8xf32> to vector<2x1x8xf32>
    %90 = vector.broadcast %89 : vector<2x1x8xf32> to vector<2x8x8xf32>
    %91 = arith.addf %88, %90 : vector<2x8x8xf32>
    %cst_33 = arith.constant dense<0xFF800000> : vector<2x8xf32>
    %92 = vector.multi_reduction <maximumf>, %91, %cst_33 [2] : vector<2x8x8xf32> to vector<2x8xf32>
    %93 = vector.shape_cast %92 : vector<2x8xf32> to vector<2x8x1xf32>
    %94 = vector.broadcast %93 : vector<2x8x1xf32> to vector<2x8x8xf32>
    %95 = arith.subf %91, %94 : vector<2x8x8xf32>
    %96 = math.exp %95 : vector<2x8x8xf32>
    %cst_34 = arith.constant dense<0.000000e+00> : vector<2x8xf32>
    %97 = vector.multi_reduction <add>, %96, %cst_34 [2] : vector<2x8x8xf32> to vector<2x8xf32>
    %98 = vector.shape_cast %97 : vector<2x8xf32> to vector<2x8x1xf32>
    %99 = tpu.reciprocal %98 {approx = true} : vector<2x8x1xf32> -> vector<2x8x1xf32>
    %100 = vector.broadcast %99 : vector<2x8x1xf32> to vector<2x8x8xf32>
    %101 = arith.mulf %96, %100 : vector<2x8x8xf32>
    %102 = arith.truncf %101 : vector<2x8x8xf32> to vector<2x8x8xbf16>
    "tpu.trace_start"() <{level = 10 : i32, message = "bqk,bkd->bqd"}> : () -> ()
    %cst_35 = arith.constant dense<0.000000e+00> : vector<2x8x8xf32>
    %103 = tpu.matmul %102, %85, %cst_35 {dimension_numbers = #tpu.dot_dimension_numbers<[2], [1], [1], [2], [0, 0, 0, 1, 1, 2], [0], [0]>} : vector<2x8x8xbf16>, vector<2x8x8xbf16>, vector<2x8x8xf32> -> vector<2x8x8xf32>
    "tpu.trace_stop"() : () -> ()
    %104 = vector.extract_strided_slice %40 {offsets = [0, 0, 24], sizes = [2, 8, 8], strides = [1, 1, 1]} : vector<2x8x96xbf16> to vector<2x8x8xbf16>
    %105 = vector.extract_strided_slice %40 {offsets = [0, 0, 56], sizes = [2, 8, 8], strides = [1, 1, 1]} : vector<2x8x96xbf16> to vector<2x8x8xbf16>
    %106 = vector.extract_strided_slice %40 {offsets = [0, 0, 88], sizes = [2, 8, 8], strides = [1, 1, 1]} : vector<2x8x96xbf16> to vector<2x8x8xbf16>
    "tpu.trace_start"() <{level = 10 : i32, message = "bqd,bkd->bqk"}> : () -> ()
    %cst_36 = arith.constant dense<0.000000e+00> : vector<2x8x8xf32>
    %107 = tpu.matmul %104, %105, %cst_36 {dimension_numbers = #tpu.dot_dimension_numbers<[2], [2], [1], [1], [0, 0, 0, 1, 1, 1], [0], [0]>} : vector<2x8x8xbf16>, vector<2x8x8xbf16>, vector<2x8x8xf32> -> vector<2x8x8xf32>
    "tpu.trace_stop"() : () -> ()
    %cst_37 = arith.constant 0.353553385 : f32
    %108 = vector.broadcast %cst_37 : f32 to vector<2x8x8xf32>
    %109 = arith.mulf %107, %108 : vector<2x8x8xf32>
    %110 = vector.shape_cast %4 : vector<2x8xf32> to vector<2x1x8xf32>
    %111 = vector.broadcast %110 : vector<2x1x8xf32> to vector<2x8x8xf32>
    %112 = arith.addf %109, %111 : vector<2x8x8xf32>
    %cst_38 = arith.constant dense<0xFF800000> : vector<2x8xf32>
    %113 = vector.multi_reduction <maximumf>, %112, %cst_38 [2] : vector<2x8x8xf32> to vector<2x8xf32>
    %114 = vector.shape_cast %113 : vector<2x8xf32> to vector<2x8x1xf32>
    %115 = vector.broadcast %114 : vector<2x8x1xf32> to vector<2x8x8xf32>
    %116 = arith.subf %112, %115 : vector<2x8x8xf32>
    %117 = math.exp %116 : vector<2x8x8xf32>
    %cst_39 = arith.constant dense<0.000000e+00> : vector<2x8xf32>
    %118 = vector.multi_reduction <add>, %117, %cst_39 [2] : vector<2x8x8xf32> to vector<2x8xf32>
    %119 = vector.shape_cast %118 : vector<2x8xf32> to vector<2x8x1xf32>
    %120 = tpu.reciprocal %119 {approx = true} : vector<2x8x1xf32> -> vector<2x8x1xf32>
    %121 = vector.broadcast %120 : vector<2x8x1xf32> to vector<2x8x8xf32>
    %122 = arith.mulf %117, %121 : vector<2x8x8xf32>
    %123 = arith.truncf %122 : vector<2x8x8xf32> to vector<2x8x8xbf16>
    "tpu.trace_start"() <{level = 10 : i32, message = "bqk,bkd->bqd"}> : () -> ()
    %cst_40 = arith.constant dense<0.000000e+00> : vector<2x8x8xf32>
    %124 = tpu.matmul %123, %106, %cst_40 {dimension_numbers = #tpu.dot_dimension_numbers<[2], [1], [1], [2], [0, 0, 0, 1, 1, 2], [0], [0]>} : vector<2x8x8xbf16>, vector<2x8x8xbf16>, vector<2x8x8xf32> -> vector<2x8x8xf32>
    "tpu.trace_stop"() : () -> ()
    %125 = tpu.concatenate %61, %82, %103, %124 in 2 : vector<2x8x8xf32>, vector<2x8x8xf32>, vector<2x8x8xf32>, vector<2x8x8xf32> -> vector<2x8x32xf32>
    %126 = vector.shape_cast %125 : vector<2x8x32xf32> to vector<16x32xf32>
    %127 = arith.truncf %126 : vector<16x32xf32> to vector<16x32xbf16>
    %c0_41 = arith.constant 0 : index
    %c0_42 = arith.constant 0 : index
    %c0_43 = arith.constant 0 : index
    %128 = vector.load %arg7[%c0_41, %c0_42, %c0_43] : memref<1x32x32xbf16, #tpu.memory_space<vmem>>, vector<1x32x32xbf16>
    %129 = vector.shape_cast %128 : vector<1x32x32xbf16> to vector<32x32xbf16>
    %cst_44 = arith.constant dense<0.000000e+00> : vector<16x32xf32>
    %130 = tpu.matmul %127, %129, %cst_44 {dimension_numbers = #tpu.dot_dimension_numbers<[1], [0], [0], [1], [0, 0, 1, 1], [], []>} : vector<16x32xbf16>, vector<32x32xbf16>, vector<16x32xf32> -> vector<16x32xf32>
    %c0_45 = arith.constant 0 : index
    %c0_46 = arith.constant 0 : index
    %c0_47 = arith.constant 0 : index
    %131 = vector.load %arg8[%c0_45, %c0_46, %c0_47] : memref<1x1x32xf32, #tpu.memory_space<vmem>>, vector<1x1x32xf32>
    %132 = vector.shape_cast %131 : vector<1x1x32xf32> to vector<1x32xf32>
    %133 = vector.broadcast %132 : vector<1x32xf32> to vector<16x32xf32>
    %134 = arith.addf %130, %133 : vector<16x32xf32>
    %135 = arith.addf %3, %134 : vector<16x32xf32>
    %c0_48 = arith.constant 0 : index
    %c0_49 = arith.constant 0 : index
    %c0_50 = arith.constant 0 : index
    %136 = vector.load %arg9[%c0_48, %c0_49, %c0_50] : memref<1x1x32xf32, #tpu.memory_space<vmem>>, vector<1x1x32xf32>
    %137 = vector.shape_cast %136 : vector<1x1x32xf32> to vector<1x32xf32>
    %c0_51 = arith.constant 0 : index
    %c0_52 = arith.constant 0 : index
    %c0_53 = arith.constant 0 : index
    %138 = vector.load %arg10[%c0_51, %c0_52, %c0_53] : memref<1x1x32xf32, #tpu.memory_space<vmem>>, vector<1x1x32xf32>
    %139 = vector.shape_cast %138 : vector<1x1x32xf32> to vector<1x32xf32>
    %cst_54 = arith.constant dense<0.000000e+00> : vector<16xf32>
    %140 = vector.multi_reduction <add>, %135, %cst_54 [1] : vector<16x32xf32> to vector<16xf32>
    %141 = vector.shape_cast %140 : vector<16xf32> to vector<16x1xf32>
    %cst_55 = arith.constant 3.200000e+01 : f32
    %142 = vector.broadcast %cst_55 : f32 to vector<16x1xf32>
    %143 = arith.divf %141, %142 : vector<16x1xf32>
    %144 = vector.broadcast %143 : vector<16x1xf32> to vector<16x32xf32>
    %145 = arith.subf %135, %144 : vector<16x32xf32>
    %146 = arith.mulf %145, %145 : vector<16x32xf32>
    %cst_56 = arith.constant dense<0.000000e+00> : vector<16xf32>
    %147 = vector.multi_reduction <add>, %146, %cst_56 [1] : vector<16x32xf32> to vector<16xf32>
    %148 = vector.shape_cast %147 : vector<16xf32> to vector<16x1xf32>
    %cst_57 = arith.constant 3.200000e+01 : f32
    %149 = vector.broadcast %cst_57 : f32 to vector<16x1xf32>
    %150 = arith.divf %148, %149 : vector<16x1xf32>
    %151 = vector.broadcast %143 : vector<16x1xf32> to vector<16x32xf32>
    %152 = arith.subf %135, %151 : vector<16x32xf32>
    %cst_58 = arith.constant 9.99999974E-6 : f32
    %153 = vector.broadcast %cst_58 : f32 to vector<16x1xf32>
    %154 = arith.addf %150, %153 : vector<16x1xf32>
    %155 = math.rsqrt %154 : vector<16x1xf32>
    %156 = vector.broadcast %155 : vector<16x1xf32> to vector<16x32xf32>
    %157 = arith.mulf %152, %156 : vector<16x32xf32>
    %158 = vector.broadcast %137 : vector<1x32xf32> to vector<16x32xf32>
    %159 = arith.mulf %157, %158 : vector<16x32xf32>
    %160 = vector.broadcast %139 : vector<1x32xf32> to vector<16x32xf32>
    %161 = arith.addf %159, %160 : vector<16x32xf32>
    %162 = arith.truncf %161 : vector<16x32xf32> to vector<16x32xbf16>
    %c0_59 = arith.constant 0 : index
    %c0_60 = arith.constant 0 : index
    %c0_61 = arith.constant 0 : index
    %163 = vector.load %arg11[%c0_59, %c0_60, %c0_61] : memref<1x32x64xbf16, #tpu.memory_space<vmem>>, vector<1x32x64xbf16>
    %164 = vector.shape_cast %163 : vector<1x32x64xbf16> to vector<32x64xbf16>
    %cst_62 = arith.constant dense<0.000000e+00> : vector<16x64xf32>
    %165 = tpu.matmul %162, %164, %cst_62 {dimension_numbers = #tpu.dot_dimension_numbers<[1], [0], [0], [1], [0, 0, 1, 1], [], []>} : vector<16x32xbf16>, vector<32x64xbf16>, vector<16x64xf32> -> vector<16x64xf32>
    %c0_63 = arith.constant 0 : index
    %c0_64 = arith.constant 0 : index
    %c0_65 = arith.constant 0 : index
    %166 = vector.load %arg12[%c0_63, %c0_64, %c0_65] : memref<1x1x64xf32, #tpu.memory_space<vmem>>, vector<1x1x64xf32>
    %167 = vector.shape_cast %166 : vector<1x1x64xf32> to vector<1x64xf32>
    %168 = vector.broadcast %167 : vector<1x64xf32> to vector<16x64xf32>
    %169 = arith.addf %165, %168 : vector<16x64xf32>
    %cst_66 = arith.constant 0.000000e+00 : f32
    %170 = vector.broadcast %cst_66 : f32 to vector<16x64xf32>
    %171 = arith.maximumf %169, %170 : vector<16x64xf32>
    %172 = arith.truncf %171 : vector<16x64xf32> to vector<16x64xbf16>
    %c0_67 = arith.constant 0 : index
    %c0_68 = arith.constant 0 : index
    %c0_69 = arith.constant 0 : index
    %173 = vector.load %arg13[%c0_67, %c0_68, %c0_69] : memref<1x64x32xbf16, #tpu.memory_space<vmem>>, vector<1x64x32xbf16>
    %174 = vector.shape_cast %173 : vector<1x64x32xbf16> to vector<64x32xbf16>
    %cst_70 = arith.constant dense<0.000000e+00> : vector<16x32xf32>
    %175 = tpu.matmul %172, %174, %cst_70 {dimension_numbers = #tpu.dot_dimension_numbers<[1], [0], [0], [1], [0, 0, 1, 1], [], []>} : vector<16x64xbf16>, vector<64x32xbf16>, vector<16x32xf32> -> vector<16x32xf32>
    %c0_71 = arith.constant 0 : index
    %c0_72 = arith.constant 0 : index
    %c0_73 = arith.constant 0 : index
    %176 = vector.load %arg14[%c0_71, %c0_72, %c0_73] : memref<1x1x32xf32, #tpu.memory_space<vmem>>, vector<1x1x32xf32>
    %177 = vector.shape_cast %176 : vector<1x1x32xf32> to vector<1x32xf32>
    %178 = vector.broadcast %177 : vector<1x32xf32> to vector<16x32xf32>
    %179 = arith.addf %175, %178 : vector<16x32xf32>
    %180 = arith.addf %135, %179 : vector<16x32xf32>
    %c0_74 = arith.constant 0 : index
    %c0_75 = arith.constant 0 : index
    %181 = vector.load %arg15[%c0_74, %c0_75] : memref<16x32xf32, #tpu.memory_space<vmem>>, vector<16x32xf32>
    tpu.vector_store %arg15[%c0_74, %c0_75], %180 {strides = array<i32>} : memref<16x32xf32, #tpu.memory_space<vmem>>, vector<16x32xf32>,
    return
  }
  func.func @transform_0(%arg0: i32) -> (i32, i32) {
    %c0_i32 = arith.constant 0 : i32
    %c0_i32_0 = arith.constant 0 : i32
    %c0_i32_1 = arith.constant 0 : i32
    return %c0_i32, %c0_i32_0 : i32, i32
  }
  func.func @transform_1(%arg0: i32) -> (i32, i32) {
    %c0_i32 = arith.constant 0 : i32
    %c0_i32_0 = arith.constant 0 : i32
    %c0_i32_1 = arith.constant 0 : i32
    return %c0_i32, %c0_i32_0 : i32, i32
  }
  func.func @transform_2(%arg0: i32) -> (i32, i32, i32) {
    %c0_i32 = arith.constant 0 : i32
    %c0_i32_0 = arith.constant 0 : i32
    %c0_i32_1 = arith.constant 0 : i32
    return %arg0, %c0_i32, %c0_i32_0 : i32, i32, i32
  }
  func.func @transform_3(%arg0: i32) -> (i32, i32, i32) {
    %c0_i32 = arith.constant 0 : i32
    %c0_i32_0 = arith.constant 0 : i32
    %c0_i32_1 = arith.constant 0 : i32
    return %arg0, %c0_i32, %c0_i32_0 : i32, i32, i32
  }
  func.func @transform_4(%arg0: i32) -> (i32, i32, i32) {
    %c0_i32 = arith.constant 0 : i32
    %c0_i32_0 = arith.constant 0 : i32
    %c0_i32_1 = arith.constant 0 : i32
    return %arg0, %c0_i32, %c0_i32_0 : i32, i32, i32
  }
  func.func @transform_5(%arg0: i32) -> (i32, i32, i32) {
    %c0_i32 = arith.constant 0 : i32
    %c0_i32_0 = arith.constant 0 : i32
    %c0_i32_1 = arith.constant 0 : i32
    return %arg0, %c0_i32, %c0_i32_0 : i32, i32, i32
  }
  func.func @transform_6(%arg0: i32) -> (i32, i32, i32) {
    %c0_i32 = arith.constant 0 : i32
    %c0_i32_0 = arith.constant 0 : i32
    %c0_i32_1 = arith.constant 0 : i32
    return %arg0, %c0_i32, %c0_i32_0 : i32, i32, i32
  }
  func.func @transform_7(%arg0: i32) -> (i32, i32, i32) {
    %c0_i32 = arith.constant 0 : i32
    %c0_i32_0 = arith.constant 0 : i32
    %c0_i32_1 = arith.constant 0 : i32
    return %arg0, %c0_i32, %c0_i32_0 : i32, i32, i32
  }
  func.func @transform_8(%arg0: i32) -> (i32, i32, i32) {
    %c0_i32 = arith.constant 0 : i32
    %c0_i32_0 = arith.constant 0 : i32
    %c0_i32_1 = arith.constant 0 : i32
    return %arg0, %c0_i32, %c0_i32_0 : i32, i32, i32
  }
  func.func @transform_9(%arg0: i32) -> (i32, i32, i32) {
    %c0_i32 = arith.constant 0 : i32
    %c0_i32_0 = arith.constant 0 : i32
    %c0_i32_1 = arith.constant 0 : i32
    return %arg0, %c0_i32, %c0_i32_0 : i32, i32, i32
  }
  func.func @transform_10(%arg0: i32) -> (i32, i32, i32) {
    %c0_i32 = arith.constant 0 : i32
    %c0_i32_0 = arith.constant 0 : i32
    %c0_i32_1 = arith.constant 0 : i32
    return %arg0, %c0_i32, %c0_i32_0 : i32, i32, i32
  }
  func.func @transform_11(%arg0: i32) -> (i32, i32, i32) {
    %c0_i32 = arith.constant 0 : i32
    %c0_i32_0 = arith.constant 0 : i32
    %c0_i32_1 = arith.constant 0 : i32
    return %arg0, %c0_i32, %c0_i32_0 : i32, i32, i32
  }
  func.func @transform_12(%arg0: i32) -> (i32, i32, i32) {
    %c0_i32 = arith.constant 0 : i32
    %c0_i32_0 = arith.constant 0 : i32
    %c0_i32_1 = arith.constant 0 : i32
    return %arg0, %c0_i32, %c0_i32_0 : i32, i32, i32
  }
  func.func @transform_13(%arg0: i32) -> (i32, i32, i32) {
    %c0_i32 = arith.constant 0 : i32
    %c0_i32_0 = arith.constant 0 : i32
    %c0_i32_1 = arith.constant 0 : i32
    return %arg0, %c0_i32, %c0_i32_0 : i32, i32, i32
  }
  func.func @transform_14(%arg0: i32) -> (i32, i32) {
    %c0_i32 = arith.constant 0 : i32
    %c0_i32_0 = arith.constant 0 : i32
    %c0_i32_1 = arith.constant 0 : i32
    return %c0_i32, %c0_i32_0 : i32, i32
  }
}

</mosaic_0001>

<llo_original>
// kernel: tpu_custom_call.1
$region0: #{tpu_custom_call.1}
  #allocation0 [shape = 'u32[]', space=smem, size = 0x4, offset = 0x4, fixed_abs, tag = 'smem constant byte address 0x4 - core index']
  #allocation1 [shape = 'u32[144,128]{1,0:T(1,128)}', space=vmem, size = 0x12000, scoped, tag = 'internal scratch']
  %s0 = inlined_call_operand.hbm [shape: f32[16,32], index: 0, kind: input, shape index: {}]
  %s1 = inlined_call_operand.vmem [shape: f32[2,8], index: 1, kind: input, shape index: {}]
  %s2 = inlined_call_operand.vmem [shape: f32[2,1,32], index: 2, kind: input, shape index: {}]
  %s3 = inlined_call_operand.vmem [shape: f32[2,1,32], index: 3, kind: input, shape index: {}]
  %s4 = inlined_call_operand.vmem [shape: bf16[2,32,96], index: 4, kind: input, shape index: {}]
  %s5 = inlined_call_operand.vmem [shape: f32[2,1,96], index: 5, kind: input, shape index: {}]
  %s6 = inlined_call_operand.vmem [shape: bf16[2,32,32], index: 6, kind: input, shape index: {}]
  %s7 = inlined_call_operand.vmem [shape: f32[2,1,32], index: 7, kind: input, shape index: {}]
  %s8 = inlined_call_operand.vmem [shape: f32[2,1,32], index: 8, kind: input, shape index: {}]
  %s9 = inlined_call_operand.hbm [shape: f32[2,1,32], index: 9, kind: input, shape index: {}]
  %s10 = inlined_call_operand.vmem [shape: bf16[2,32,64], index: 10, kind: input, shape index: {}]
  %s11 = inlined_call_operand.hbm [shape: f32[2,1,64], index: 11, kind: input, shape index: {}]
  %s12 = inlined_call_operand.vmem [shape: bf16[2,64,32], index: 12, kind: input, shape index: {}]
  %s13 = inlined_call_operand.vmem [shape: f32[2,1,32], index: 13, kind: input, shape index: {}]
  %s14 = inlined_call_operand.hbm [shape: f32[16,32], index: 14, kind: output, shape index: {}]
  %s15 = sld [smem:[#allocation0]]
  $region105: #{tpu_custom_call.1} parent=0
    _
  %s17 = ssub.s32 1, %s15
  %s18 = scalar_select 0, %s17, %s15
  $region1: #{tpu_custom_call.1} parent=0
    #allocation2 [shape = 'u8[8192]{0}', space=vmem, size = 0x2000, scoped, tag = 'input window, operand 0, single buffered']
    #allocation3 [shape = 's32[2]{0}', space=sflag, size = 0x8, scoped, tag = 'scoped memory for tpu_custom_call.1']
    #allocation4 [shape = 's32[2]{0}', space=sflag, size = 0x8, scoped, tag = 'scoped memory for tpu_custom_call.1']
    #allocation5 [shape = 'u8[1024]{0}', space=vmem, size = 0x400, scoped, tag = 'input window, operand 9']
    #allocation6 [shape = 's32[2]{0}', space=sflag, size = 0x8, scoped, tag = 'scoped memory for tpu_custom_call.1']
    #allocation7 [shape = 'u8[1024]{0}', space=vmem, size = 0x400, scoped, tag = 'input window, operand 11']
    #allocation8 [shape = 'u8[8192]{0}', space=vmem, size = 0x2000, scoped, tag = 'output window, operand 0, single buffered']
    %19 = vsyncpa [#allocation3], 0
    %20 = vsyncpa [#allocation6], 0
    %s21 = scalar_lea.sflag [#allocation6], 1
    %22 = vsyncpa %s21, 0
    %23 = vsyncpa [#allocation4], 0
    loop: start=0, step=1, limit=4
    $region2: #{tpu_custom_call.1} parent=1 // loop_pre_header
      _
    $region3: #{tpu_custom_call.1} parent=1 // loop_header
      %s25 = sphi 0, %s29
      %p26 = scmp.ge.s32.totalorder %s25, 4
      %s33 = sphi 0, %s33
      %s35 = sphi 0, %s33
      %s36 = sphi 0, %s35
      %s50 = sphi 0, %s36
      %s54 = sphi 0, %s54
      %s56 = sphi 0, %s54
      %s57 = sphi 0, %s56
      %s71 = sphi 0, %s57
      %s77 = sphi 0, %s79
      %s80 = sphi 0, %s77
      %s81 = sphi 0, %s80
      %s97 = sphi 0, %s81
      %s103 = sphi 0, %s105
      %s106 = sphi 0, %s103
      %s107 = sphi 0, %s106
      %s123 = sphi 0, %s107
      %s129 = sphi 0, %s131
      %s132 = sphi 0, %s129
      %s133 = sphi 0, %s132
      %s149 = sphi 0, %s133
      %s155 = sphi 0, %s157
      %s158 = sphi 0, %s155
      %s159 = sphi 0, %s158
      %s175 = sphi 0, %s159
      %s181 = sphi 0, %s183
      %s184 = sphi 0, %s181
      %s185 = sphi 0, %s184
      %s201 = sphi 0, %s185
      %s207 = sphi 0, %s209
      %s210 = sphi 0, %s207
      %s211 = sphi 0, %s210
      %s227 = sphi 0, %s211
      %s233 = sphi 0, %s235
      %s236 = sphi 0, %s233
      %s237 = sphi 0, %s236
      %s253 = sphi 0, %s237
      %s259 = sphi 0, %s261
      %s262 = sphi 0, %s259
      %s263 = sphi 0, %s262
      %s279 = sphi 0, %s263
      %s285 = sphi 0, %s287
      %s288 = sphi 0, %s285
      %s289 = sphi 0, %s288
      %s305 = sphi 0, %s289
      %s311 = sphi 0, %s313
      %s314 = sphi 0, %s311
      %s315 = sphi 0, %s314
      %s331 = sphi 0, %s315
      %s337 = sphi 0, %s339
      %s340 = sphi 0, %s337
      %s341 = sphi 0, %s340
      %s357 = sphi 0, %s341
      %s363 = sphi 0, %s365
      %s366 = sphi 0, %s363
      %s367 = sphi 0, %s366
      %s383 = sphi 0, %s367
      %s387 = sphi 0, %s387
      %s389 = sphi 0, %s387
      %s390 = sphi 0, %s389
      %s404 = sphi 0, %s390
    $region4: #{tpu_custom_call.1} parent=1 // loop_header_branch
      %28 = sbr.rel (%p26) target = $region8
    $region5: #{tpu_custom_call.1} parent=1 // loop_body
      %s30 = ssub.s32 %s25, 1
      %s31 = ssub.s32 %s25, 2
      %s32 = sadd.s32 %s25, 1
      %s34 = sadd.s32 %s33, 1
      %p37 = scmp.eq.s32.totalorder %s25, 1
      %p38 = scmp.ne.s32.totalorder %s33, %s35
      %p39 = scmp.eq.s32.totalorder %s25, 0
      %p40 = por %p38, %p39
      %p41 = scmp.ne.s32.totalorder %s33, %s35
      %p42 = scmp.eq.s32.totalorder %s30, 1
      %p43 = por %p41, %p42
      %p44 = scmp.ne.s32.totalorder %s35, %s36
      %p45 = scmp.eq.s32.totalorder %s30, 0
      %p46 = por %p44, %p45
      %p47 = scmp.ne.s32.totalorder %s35, %s36
      %p48 = scmp.eq.s32.totalorder %s31, 1
      %p49 = por %p47, %p48
      %p51 = scmp.ne.s32.totalorder %s36, %s50
      %p52 = scmp.eq.s32.totalorder %s31, 0
      %p53 = por %p51, %p52
      %s55 = sadd.s32 %s54, 1
      %p58 = scmp.eq.s32.totalorder %s25, 1
      %p59 = scmp.ne.s32.totalorder %s54, %s56
      %p60 = scmp.eq.s32.totalorder %s25, 0
      %p61 = por %p59, %p60
      %p62 = scmp.ne.s32.totalorder %s54, %s56
      %p63 = scmp.eq.s32.totalorder %s30, 1
      %p64 = por %p62, %p63
      %p65 = scmp.ne.s32.totalorder %s56, %s57
      %p66 = scmp.eq.s32.totalorder %s30, 0
      %p67 = por %p65, %p66
      %p68 = scmp.ne.s32.totalorder %s56, %s57
      %p69 = scmp.eq.s32.totalorder %s31, 1
      %p70 = por %p68, %p69
      %p72 = scmp.ne.s32.totalorder %s57, %s71
      %p73 = scmp.eq.s32.totalorder %s31, 0
      %p74 = por %p72, %p73
      %s75 = ssub.s32 %s25, %s32
      %p76 = scmp.eq.s32.totalorder %s75, 0
      %s78 = sadd.s32 %s77, 1
      %s79 = scalar_select %p76, %s77, %s78
      %p82 = pneg %p76
      %p83 = scmp.eq.s32.totalorder %s25, 1
      %p84 = por %p82, %p83
      %p85 = scmp.ne.s32.totalorder %s77, %s80
      %p86 = scmp.eq.s32.totalorder %s25, 0
      %p87 = por %p85, %p86
      %p88 = scmp.ne.s32.totalorder %s77, %s80
      %p89 = scmp.eq.s32.totalorder %s30, 1
      %p90 = por %p88, %p89
      %p91 = scmp.ne.s32.totalorder %s80, %s81
      %p92 = scmp.eq.s32.totalorder %s30, 0
      %p93 = por %p91, %p92
      %p94 = scmp.ne.s32.totalorder %s80, %s81
      %p95 = scmp.eq.s32.totalorder %s31, 1
      %p96 = por %p94, %p95
      %p98 = scmp.ne.s32.totalorder %s81, %s97
      %p99 = scmp.eq.s32.totalorder %s31, 0
      %p100 = por %p98, %p99
      %s101 = ssub.s32 %s25, %s32
      %p102 = scmp.eq.s32.totalorder %s101, 0
      %s104 = sadd.s32 %s103, 1
      %s105 = scalar_select %p102, %s103, %s104
      %p108 = pneg %p102
      %p109 = scmp.eq.s32.totalorder %s25, 1
      %p110 = por %p108, %p109
      %p111 = scmp.ne.s32.totalorder %s103, %s106
      %p112 = scmp.eq.s32.totalorder %s25, 0
      %p113 = por %p111, %p112
      %p114 = scmp.ne.s32.totalorder %s103, %s106
      %p115 = scmp.eq.s32.totalorder %s30, 1
      %p116 = por %p114, %p115
      %p117 = scmp.ne.s32.totalorder %s106, %s107
      %p118 = scmp.eq.s32.totalorder %s30, 0
      %p119 = por %p117, %p118
      %p120 = scmp.ne.s32.totalorder %s106, %s107
      %p121 = scmp.eq.s32.totalorder %s31, 1
      %p122 = por %p120, %p121
      %p124 = scmp.ne.s32.totalorder %s107, %s123
      %p125 = scmp.eq.s32.totalorder %s31, 0
      %p126 = por %p124, %p125
      %s127 = ssub.s32 %s25, %s32
      %p128 = scmp.eq.s32.totalorder %s127, 0
      %s130 = sadd.s32 %s129, 1
      %s131 = scalar_select %p128, %s129, %s130
      %p134 = pneg %p128
      %p135 = scmp.eq.s32.totalorder %s25, 1
      %p136 = por %p134, %p135
      %p137 = scmp.ne.s32.totalorder %s129, %s132
      %p138 = scmp.eq.s32.totalorder %s25, 0
      %p139 = por %p137, %p138
      %p140 = scmp.ne.s32.totalorder %s129, %s132
      %p141 = scmp.eq.s32.totalorder %s30, 1
      %p142 = por %p140, %p141
      %p143 = scmp.ne.s32.totalorder %s132, %s133
      %p144 = scmp.eq.s32.totalorder %s30, 0
      %p145 = por %p143, %p144
      %p146 = scmp.ne.s32.totalorder %s132, %s133
      %p147 = scmp.eq.s32.totalorder %s31, 1
      %p148 = por %p146, %p147
      %p150 = scmp.ne.s32.totalorder %s133, %s149
      %p151 = scmp.eq.s32.totalorder %s31, 0
      %p152 = por %p150, %p151
      %s153 = ssub.s32 %s25, %s32
      %p154 = scmp.eq.s32.totalorder %s153, 0
      %s156 = sadd.s32 %s155, 1
      %s157 = scalar_select %p154, %s155, %s156
      %p160 = pneg %p154
      %p161 = scmp.eq.s32.totalorder %s25, 1
      %p162 = por %p160, %p161
      %p163 = scmp.ne.s32.totalorder %s155, %s158
      %p164 = scmp.eq.s32.totalorder %s25, 0
      %p165 = por %p163, %p164
      %p166 = scmp.ne.s32.totalorder %s155, %s158
      %p167 = scmp.eq.s32.totalorder %s30, 1
      %p168 = por %p166, %p167
      %p169 = scmp.ne.s32.totalorder %s158, %s159
      %p170 = scmp.eq.s32.totalorder %s30, 0
      %p171 = por %p169, %p170
      %p172 = scmp.ne.s32.totalorder %s158, %s159
      %p173 = scmp.eq.s32.totalorder %s31, 1
      %p174 = por %p172, %p173
      %p176 = scmp.ne.s32.totalorder %s159, %s175
      %p177 = scmp.eq.s32.totalorder %s31, 0
      %p178 = por %p176, %p177
      %s179 = ssub.s32 %s25, %s32
      %p180 = scmp.eq.s32.totalorder %s179, 0
      %s182 = sadd.s32 %s181, 1
      %s183 = scalar_select %p180, %s181, %s182
      %p186 = pneg %p180
      %p187 = scmp.eq.s32.totalorder %s25, 1
      %p188 = por %p186, %p187
      %p189 = scmp.ne.s32.totalorder %s181, %s184
      %p190 = scmp.eq.s32.totalorder %s25, 0
      %p191 = por %p189, %p190
      %p192 = scmp.ne.s32.totalorder %s181, %s184
      %p193 = scmp.eq.s32.totalorder %s30, 1
      %p194 = por %p192, %p193
      %p195 = scmp.ne.s32.totalorder %s184, %s185
      %p196 = scmp.eq.s32.totalorder %s30, 0
      %p197 = por %p195, %p196
      %p198 = scmp.ne.s32.totalorder %s184, %s185
      %p199 = scmp.eq.s32.totalorder %s31, 1
      %p200 = por %p198, %p199
      %p202 = scmp.ne.s32.totalorder %s185, %s201
      %p203 = scmp.eq.s32.totalorder %s31, 0
      %p204 = por %p202, %p203
      %s205 = ssub.s32 %s25, %s32
      %p206 = scmp.eq.s32.totalorder %s205, 0
      %s208 = sadd.s32 %s207, 1
      %s209 = scalar_select %p206, %s207, %s208
      %p212 = pneg %p206
      %p213 = scmp.eq.s32.totalorder %s25, 1
      %p214 = por %p212, %p213
      %p215 = scmp.ne.s32.totalorder %s207, %s210
      %p216 = scmp.eq.s32.totalorder %s25, 0
      %p217 = por %p215, %p216
      %p218 = scmp.ne.s32.totalorder %s207, %s210
      %p219 = scmp.eq.s32.totalorder %s30, 1
      %p220 = por %p218, %p219
      %p221 = scmp.ne.s32.totalorder %s210, %s211
      %p222 = scmp.eq.s32.totalorder %s30, 0
      %p223 = por %p221, %p222
      %p224 = scmp.ne.s32.totalorder %s210, %s211
      %p225 = scmp.eq.s32.totalorder %s31, 1
      %p226 = por %p224, %p225
      %p228 = scmp.ne.s32.totalorder %s211, %s227
      %p229 = scmp.eq.s32.totalorder %s31, 0
      %p230 = por %p228, %p229
      %s231 = ssub.s32 %s25, %s32
      %p232 = scmp.eq.s32.totalorder %s231, 0
      %s234 = sadd.s32 %s233, 1
      %s235 = scalar_select %p232, %s233, %s234
      %p238 = pneg %p232
      %p239 = scmp.eq.s32.totalorder %s25, 1
      %p240 = por %p238, %p239
      %p241 = scmp.ne.s32.totalorder %s233, %s236
      %p242 = scmp.eq.s32.totalorder %s25, 0
      %p243 = por %p241, %p242
      %p244 = scmp.ne.s32.totalorder %s233, %s236
      %p245 = scmp.eq.s32.totalorder %s30, 1
      %p246 = por %p244, %p245
      %p247 = scmp.ne.s32.totalorder %s236, %s237
      %p248 = scmp.eq.s32.totalorder %s30, 0
      %p249 = por %p247, %p248
      %p250 = scmp.ne.s32.totalorder %s236, %s237
      %p251 = scmp.eq.s32.totalorder %s31, 1
      %p252 = por %p250, %p251
      %p254 = scmp.ne.s32.totalorder %s237, %s253
      %p255 = scmp.eq.s32.totalorder %s31, 0
      %p256 = por %p254, %p255
      %s257 = ssub.s32 %s25, %s32
      %p258 = scmp.eq.s32.totalorder %s257, 0
      %s260 = sadd.s32 %s259, 1
      %s261 = scalar_select %p258, %s259, %s260
      %p264 = pneg %p258
      %p265 = scmp.eq.s32.totalorder %s25, 1
      %p266 = por %p264, %p265
      %p267 = scmp.ne.s32.totalorder %s259, %s262
      %p268 = scmp.eq.s32.totalorder %s25, 0
      %p269 = por %p267, %p268
      %p270 = scmp.ne.s32.totalorder %s259, %s262
      %p271 = scmp.eq.s32.totalorder %s30, 1
      %p272 = por %p270, %p271
      %p273 = scmp.ne.s32.totalorder %s262, %s263
      %p274 = scmp.eq.s32.totalorder %s30, 0
      %p275 = por %p273, %p274
      %p276 = scmp.ne.s32.totalorder %s262, %s263
      %p277 = scmp.eq.s32.totalorder %s31, 1
      %p278 = por %p276, %p277
      %p280 = scmp.ne.s32.totalorder %s263, %s279
      %p281 = scmp.eq.s32.totalorder %s31, 0
      %p282 = por %p280, %p281
      %s283 = ssub.s32 %s25, %s32
      %p284 = scmp.eq.s32.totalorder %s283, 0
      %s286 = sadd.s32 %s285, 1
      %s287 = scalar_select %p284, %s285, %s286
      %p290 = pneg %p284
      %p291 = scmp.eq.s32.totalorder %s25, 1
      %p292 = por %p290, %p291
      %p293 = scmp.ne.s32.totalorder %s285, %s288
      %p294 = scmp.eq.s32.totalorder %s25, 0
      %p295 = por %p293, %p294
      %p296 = scmp.ne.s32.totalorder %s285, %s288
      %p297 = scmp.eq.s32.totalorder %s30, 1
      %p298 = por %p296, %p297
      %p299 = scmp.ne.s32.totalorder %s288, %s289
      %p300 = scmp.eq.s32.totalorder %s30, 0
      %p301 = por %p299, %p300
      %p302 = scmp.ne.s32.totalorder %s288, %s289
      %p303 = scmp.eq.s32.totalorder %s31, 1
      %p304 = por %p302, %p303
      %p306 = scmp.ne.s32.totalorder %s289, %s305
      %p307 = scmp.eq.s32.totalorder %s31, 0
      %p308 = por %p306, %p307
      %s309 = ssub.s32 %s25, %s32
      %p310 = scmp.eq.s32.totalorder %s309, 0
      %s312 = sadd.s32 %s311, 1
      %s313 = scalar_select %p310, %s311, %s312
      %p316 = pneg %p310
      %p317 = scmp.eq.s32.totalorder %s25, 1
      %p318 = por %p316, %p317
      %p319 = scmp.ne.s32.totalorder %s311, %s314
      %p320 = scmp.eq.s32.totalorder %s25, 0
      %p321 = por %p319, %p320
      %p322 = scmp.ne.s32.totalorder %s311, %s314
      %p323 = scmp.eq.s32.totalorder %s30, 1
      %p324 = por %p322, %p323
      %p325 = scmp.ne.s32.totalorder %s314, %s315
      %p326 = scmp.eq.s32.totalorder %s30, 0
      %p327 = por %p325, %p326
      %p328 = scmp.ne.s32.totalorder %s314, %s315
      %p329 = scmp.eq.s32.totalorder %s31, 1
      %p330 = por %p328, %p329
      %p332 = scmp.ne.s32.totalorder %s315, %s331
      %p333 = scmp.eq.s32.totalorder %s31, 0
      %p334 = por %p332, %p333
      %s335 = ssub.s32 %s25, %s32
      %p336 = scmp.eq.s32.totalorder %s335, 0
      %s338 = sadd.s32 %s337, 1
      %s339 = scalar_select %p336, %s337, %s338
      %p342 = pneg %p336
      %p343 = scmp.eq.s32.totalorder %s25, 1
      %p344 = por %p342, %p343
      %p345 = scmp.ne.s32.totalorder %s337, %s340
      %p346 = scmp.eq.s32.totalorder %s25, 0
      %p347 = por %p345, %p346
      %p348 = scmp.ne.s32.totalorder %s337, %s340
      %p349 = scmp.eq.s32.totalorder %s30, 1
      %p350 = por %p348, %p349
      %p351 = scmp.ne.s32.totalorder %s340, %s341
      %p352 = scmp.eq.s32.totalorder %s30, 0
      %p353 = por %p351, %p352
      %p354 = scmp.ne.s32.totalorder %s340, %s341
      %p355 = scmp.eq.s32.totalorder %s31, 1
      %p356 = por %p354, %p355
      %p358 = scmp.ne.s32.totalorder %s341, %s357
      %p359 = scmp.eq.s32.totalorder %s31, 0
      %p360 = por %p358, %p359
      %s361 = ssub.s32 %s25, %s32
      %p362 = scmp.eq.s32.totalorder %s361, 0
      %s364 = sadd.s32 %s363, 1
      %s365 = scalar_select %p362, %s363, %s364
      %p368 = pneg %p362
      %p369 = scmp.eq.s32.totalorder %s25, 1
      %p370 = por %p368, %p369
      %p371 = scmp.ne.s32.totalorder %s363, %s366
      %p372 = scmp.eq.s32.totalorder %s25, 0
      %p373 = por %p371, %p372
      %p374 = scmp.ne.s32.totalorder %s363, %s366
      %p375 = scmp.eq.s32.totalorder %s30, 1
      %p376 = por %p374, %p375
      %p377 = scmp.ne.s32.totalorder %s366, %s367
      %p378 = scmp.eq.s32.totalorder %s30, 0
      %p379 = por %p377, %p378
      %p380 = scmp.ne.s32.totalorder %s366, %s367
      %p381 = scmp.eq.s32.totalorder %s31, 1
      %p382 = por %p380, %p381
      %p384 = scmp.ne.s32.totalorder %s367, %s383
      %p385 = scmp.eq.s32.totalorder %s31, 0
      %p386 = por %p384, %p385
      %s388 = sadd.s32 %s387, 1
      %p391 = scmp.eq.s32.totalorder %s25, 1
      %p392 = scmp.ne.s32.totalorder %s387, %s389
      %p393 = scmp.eq.s32.totalorder %s25, 0
      %p394 = por %p392, %p393
      %p395 = scmp.ne.s32.totalorder %s387, %s389
      %p396 = scmp.eq.s32.totalorder %s30, 1
      %p397 = por %p395, %p396
      %p398 = scmp.ne.s32.totalorder %s389, %s390
      %p399 = scmp.eq.s32.totalorder %s30, 0
      %p400 = por %p398, %p399
      %p401 = scmp.ne.s32.totalorder %s389, %s390
      %p402 = scmp.eq.s32.totalorder %s31, 1
      %p403 = por %p401, %p402
      %p405 = scmp.ne.s32.totalorder %s390, %s404
      %p406 = scmp.eq.s32.totalorder %s31, 0
      %p407 = por %p405, %p406
      %p408 = scmp.le.s32.totalorder 1, %s25
      %p409 = scmp.lt.s32.totalorder %s25, 3
      %p410 = pnand %p408, %p409
      %p411 = pneg %p410
      // Predicated region
      $region9: #{tpu_custom_call.1} parent=5 // pred_check
        _
      $region10: #{tpu_custom_call.1} parent=5 // pred_check_branch
        %413 = sbr.rel (%p410) target = $region12
      $region11: #{tpu_custom_call.1} parent=5 // pred_region
        %s414 = ssub.s32 %s25, 1
        // Predicated region
        $region13: #{tpu_custom_call.1} parent=11 // pred_check
          %p415 = pneg %p46
        $region14: #{tpu_custom_call.1} parent=11 // pred_check_branch
          %417 = sbr.rel (%p415) target = $region16
        $region15: #{tpu_custom_call.1} parent=11 // pred_region
          %s419 = ssub.s32 256, 256
          %420 = vsyncadd [#allocation3], %s419
          %s421 = sshll.u32 [#allocation2], 4
          %s422 = int_to_ptr.vmem [resolvable:$true] %s421
          %427 = dma.hbm_to_vmem [thread:$0]  %s0, 256, %s422, [#allocation3], 128, 128, 8
        $region16: #{tpu_custom_call.1} parent=11 // pred_fallthru
          _
        // Predicated region
        $region17: #{tpu_custom_call.1} parent=11 // pred_check
          %p428 = pneg %p67
        $region18: #{tpu_custom_call.1} parent=11 // pred_check_branch
          %430 = sbr.rel (%p428) target = $region20
        $region19: #{tpu_custom_call.1} parent=11 // pred_region
          _
        $region20: #{tpu_custom_call.1} parent=11 // pred_fallthru
          _
      $region12: #{tpu_custom_call.1} parent=5 // pred_fallthru
        _
      %p431 = scmp.lt.s32.totalorder %s25, 2
      // Predicated region
      $region21: #{tpu_custom_call.1} parent=5 // pred_check
        %p432 = pneg %p431
      $region22: #{tpu_custom_call.1} parent=5 // pred_check_branch
        %434 = sbr.rel (%p432) target = $region24
      $region23: #{tpu_custom_call.1} parent=5 // pred_region
        // Predicated region
        $region25: #{tpu_custom_call.1} parent=23 // pred_check
          %p435 = pneg %p87
        $region26: #{tpu_custom_call.1} parent=23 // pred_check_branch
          %437 = sbr.rel (%p435) target = $region28
        $region27: #{tpu_custom_call.1} parent=23 // pred_region
          %p438 = scmp.lt.s32.totalorder %s25, 1
          %s439 = scalar_select %p438, %s25, 1
          %s440 = scalar_lea.vmem %s2, %s439
        $region28: #{tpu_custom_call.1} parent=23 // pred_fallthru
          _
        // Predicated region
        $region29: #{tpu_custom_call.1} parent=23 // pred_check
          %p441 = pneg %p113
        $region30: #{tpu_custom_call.1} parent=23 // pred_check_branch
          %443 = sbr.rel (%p441) target = $region32
        $region31: #{tpu_custom_call.1} parent=23 // pred_region
          %p444 = scmp.lt.s32.totalorder %s25, 1
          %s445 = scalar_select %p444, %s25, 1
          %s446 = scalar_lea.vmem %s3, %s445
        $region32: #{tpu_custom_call.1} parent=23 // pred_fallthru
          _
        // Predicated region
        $region33: #{tpu_custom_call.1} parent=23 // pred_check
          %p447 = pneg %p139
        $region34: #{tpu_custom_call.1} parent=23 // pred_check_branch
          %449 = sbr.rel (%p447) target = $region36
        $region35: #{tpu_custom_call.1} parent=23 // pred_region
          %p450 = scmp.lt.s32.totalorder %s25, 1
          %s451 = scalar_select %p450, %s25, 1
          %s452 = smul.addr %s451, 4
          %s453 = smul.addr %s452, 4
          %s454 = scalar_lea.vmem %s4, %s453
        $region36: #{tpu_custom_call.1} parent=23 // pred_fallthru
          _
        // Predicated region
        $region37: #{tpu_custom_call.1} parent=23 // pred_check
          %p455 = pneg %p165
        $region38: #{tpu_custom_call.1} parent=23 // pred_check_branch
          %457 = sbr.rel (%p455) target = $region40
        $region39: #{tpu_custom_call.1} parent=23 // pred_region
          %p458 = scmp.lt.s32.totalorder %s25, 1
          %s459 = scalar_select %p458, %s25, 1
          %s460 = scalar_lea.vmem %s5, %s459
        $region40: #{tpu_custom_call.1} parent=23 // pred_fallthru
          _
        // Predicated region
        $region41: #{tpu_custom_call.1} parent=23 // pred_check
          %p461 = pneg %p191
        $region42: #{tpu_custom_call.1} parent=23 // pred_check_branch
          %463 = sbr.rel (%p461) target = $region44
        $region43: #{tpu_custom_call.1} parent=23 // pred_region
          %p464 = scmp.lt.s32.totalorder %s25, 1
          %s465 = scalar_select %p464, %s25, 1
          %s466 = smul.addr %s465, 4
          %s467 = smul.addr %s466, 4
          %s468 = scalar_lea.vmem %s6, %s467
        $region44: #{tpu_custom_call.1} parent=23 // pred_fallthru
          _
        // Predicated region
        $region45: #{tpu_custom_call.1} parent=23 // pred_check
          %p469 = pneg %p217
        $region46: #{tpu_custom_call.1} parent=23 // pred_check_branch
          %471 = sbr.rel (%p469) target = $region48
        $region47: #{tpu_custom_call.1} parent=23 // pred_region
          %p472 = scmp.lt.s32.totalorder %s25, 1
          %s473 = scalar_select %p472, %s25, 1
          %s474 = scalar_lea.vmem %s7, %s473
        $region48: #{tpu_custom_call.1} parent=23 // pred_fallthru
          _
        // Predicated region
        $region49: #{tpu_custom_call.1} parent=23 // pred_check
          %p475 = pneg %p243
        $region50: #{tpu_custom_call.1} parent=23 // pred_check_branch
          %477 = sbr.rel (%p475) target = $region52
        $region51: #{tpu_custom_call.1} parent=23 // pred_region
          %p478 = scmp.lt.s32.totalorder %s25, 1
          %s479 = scalar_select %p478, %s25, 1
          %s480 = scalar_lea.vmem %s8, %s479
        $region52: #{tpu_custom_call.1} parent=23 // pred_fallthru
          _
        // Predicated region
        $region53: #{tpu_custom_call.1} parent=23 // pred_check
          %p481 = pneg %p269
        $region54: #{tpu_custom_call.1} parent=23 // pred_check_branch
          %483 = sbr.rel (%p481) target = $region56
        $region55: #{tpu_custom_call.1} parent=23 // pred_region
          %s484 = sand.u32 %s25, 1
          %s485 = scalar_lea.sflag [#allocation6], %s484
          %s486 = sand.u32 %s259, 1
          %s487 = scalar_lea.vmem [#allocation5], %s486
          %s489 = ssub.s32 16, 16
          %490 = vsyncadd %s485, %s489
          %s491 = smul.addr %s25, 16
          %s492 = scalar_lea.hbm %s9, %s491
          %s494 = sshll.u32 %s487, 4
          %s495 = int_to_ptr.vmem [resolvable:$true] %s494
          %497 = dma.hbm_to_vmem [thread:$0]  %s492, 16, %s495, %s485
        $region56: #{tpu_custom_call.1} parent=23 // pred_fallthru
          _
        // Predicated region
        $region57: #{tpu_custom_call.1} parent=23 // pred_check
          %p498 = pneg %p295
        $region58: #{tpu_custom_call.1} parent=23 // pred_check_branch
          %500 = sbr.rel (%p498) target = $region60
        $region59: #{tpu_custom_call.1} parent=23 // pred_region
          %p501 = scmp.lt.s32.totalorder %s25, 1
          %s502 = scalar_select %p501, %s25, 1
          %s503 = smul.addr %s502, 4
          %s504 = smul.addr %s503, 4
          %s505 = scalar_lea.vmem %s10, %s504
        $region60: #{tpu_custom_call.1} parent=23 // pred_fallthru
          _
        // Predicated region
        $region61: #{tpu_custom_call.1} parent=23 // pred_check
          %p506 = pneg %p321
        $region62: #{tpu_custom_call.1} parent=23 // pred_check_branch
          %508 = sbr.rel (%p506) target = $region64
        $region63: #{tpu_custom_call.1} parent=23 // pred_region
          %s509 = sand.u32 %s25, 1
          %s510 = scalar_lea.sflag [#allocation6], %s509
          %s511 = sand.u32 %s311, 1
          %s512 = scalar_lea.vmem [#allocation7], %s511
          %s514 = ssub.s32 16, 16
          %515 = vsyncadd %s510, %s514
          %s516 = smul.addr %s25, 16
          %s517 = scalar_lea.hbm %s11, %s516
          %s519 = sshll.u32 %s512, 4
          %s520 = int_to_ptr.vmem [resolvable:$true] %s519
          %522 = dma.hbm_to_vmem [thread:$0]  %s517, 16, %s520, %s510
        $region64: #{tpu_custom_call.1} parent=23 // pred_fallthru
          _
        // Predicated region
        $region65: #{tpu_custom_call.1} parent=23 // pred_check
          %p523 = pneg %p347
        $region66: #{tpu_custom_call.1} parent=23 // pred_check_branch
          %525 = sbr.rel (%p523) target = $region68
        $region67: #{tpu_custom_call.1} parent=23 // pred_region
          %p526 = scmp.lt.s32.totalorder %s25, 1
          %s527 = scalar_select %p526, %s25, 1
          %s528 = smul.addr %s527, 8
          %s529 = smul.addr %s528, 4
          %s530 = scalar_lea.vmem %s12, %s529
        $region68: #{tpu_custom_call.1} parent=23 // pred_fallthru
          _
        // Predicated region
        $region69: #{tpu_custom_call.1} parent=23 // pred_check
          %p531 = pneg %p373
        $region70: #{tpu_custom_call.1} parent=23 // pred_check_branch
          %533 = sbr.rel (%p531) target = $region72
        $region71: #{tpu_custom_call.1} parent=23 // pred_region
          %p534 = scmp.lt.s32.totalorder %s25, 1
          %s535 = scalar_select %p534, %s25, 1
          %s536 = scalar_lea.vmem %s13, %s535
        $region72: #{tpu_custom_call.1} parent=23 // pred_fallthru
          _
      $region24: #{tpu_custom_call.1} parent=5 // pred_fallthru
        _
      %p537 = scmp.le.s32.totalorder 1, %s25
      %p538 = scmp.lt.s32.totalorder %s25, 3
      %p539 = pnand %p537, %p538
      %p540 = pneg %p539
      // Predicated region
      $region73: #{tpu_custom_call.1} parent=5 // pred_check
        _
      $region74: #{tpu_custom_call.1} parent=5 // pred_check_branch
        %542 = sbr.rel (%p539) target = $region76
      $region75: #{tpu_custom_call.1} parent=5 // pred_region
        %s543 = ssub.s32 %s25, 1
        // Predicated region
        $region77: #{tpu_custom_call.1} parent=75 // pred_check
          %p544 = pneg %p46
        $region78: #{tpu_custom_call.1} parent=75 // pred_check_branch
          %546 = sbr.rel (%p544) target = $region80
        $region79: #{tpu_custom_call.1} parent=75 // pred_region
          %547 = dma.done [#allocation3], 256
        $region80: #{tpu_custom_call.1} parent=75 // pred_fallthru
          _
        %s548 = sand.u32 %s30, 1
        %s549 = scalar_lea.sflag [#allocation6], %s548
        %s550 = sand.u32 %s262, 1
        %s551 = scalar_lea.vmem [#allocation5], %s550
        // Predicated region
        $region81: #{tpu_custom_call.1} parent=75 // pred_check
          %p552 = pneg %p275
        $region82: #{tpu_custom_call.1} parent=75 // pred_check_branch
          %554 = sbr.rel (%p552) target = $region84
        $region83: #{tpu_custom_call.1} parent=75 // pred_region
          %555 = dma.done %s549, 16
        $region84: #{tpu_custom_call.1} parent=75 // pred_fallthru
          _
        %s556 = sand.u32 %s30, 1
        %s557 = scalar_lea.sflag [#allocation6], %s556
        %s558 = sand.u32 %s314, 1
        %s559 = scalar_lea.vmem [#allocation7], %s558
        // Predicated region
        $region85: #{tpu_custom_call.1} parent=75 // pred_check
          %p560 = pneg %p327
        $region86: #{tpu_custom_call.1} parent=75 // pred_check_branch
          %562 = sbr.rel (%p560) target = $region88
        $region87: #{tpu_custom_call.1} parent=75 // pred_region
          %563 = dma.done %s557, 16
        $region88: #{tpu_custom_call.1} parent=75 // pred_fallthru
          _
        %p564 = pneg %p46
        %p565 = pneg %p43
        %p566 = pneg %p67
        %p567 = pneg %p64
        %p568 = scmp.lt.s32.totalorder %s30, 1
        %s569 = scalar_select %p568, %s30, 1
        %s570 = scalar_lea.vmem %s2, %s569
        %p571 = pneg %p93
        %p572 = pneg %p90
        %p573 = scmp.lt.s32.totalorder %s30, 1
        %s574 = scalar_select %p573, %s30, 1
        %s575 = scalar_lea.vmem %s3, %s574
        %p576 = pneg %p119
        %p577 = pneg %p116
        %p578 = scmp.lt.s32.totalorder %s30, 1
        %s579 = scalar_select %p578, %s30, 1
        %s580 = smul.addr %s579, 4
        %s581 = smul.addr %s580, 4
        %s582 = scalar_lea.vmem %s4, %s581
        %p583 = pneg %p145
        %p584 = pneg %p142
        %p585 = scmp.lt.s32.totalorder %s30, 1
        %s586 = scalar_select %p585, %s30, 1
        %s587 = scalar_lea.vmem %s5, %s586
        %p588 = pneg %p171
        %p589 = pneg %p168
        %p590 = scmp.lt.s32.totalorder %s30, 1
        %s591 = scalar_select %p590, %s30, 1
        %s592 = smul.addr %s591, 4
        %s593 = smul.addr %s592, 4
        %s594 = scalar_lea.vmem %s6, %s593
        %p595 = pneg %p197
        %p596 = pneg %p194
        %p597 = scmp.lt.s32.totalorder %s30, 1
        %s598 = scalar_select %p597, %s30, 1
        %s599 = scalar_lea.vmem %s7, %s598
        %p600 = pneg %p223
        %p601 = pneg %p220
        %p602 = scmp.lt.s32.totalorder %s30, 1
        %s603 = scalar_select %p602, %s30, 1
        %s604 = scalar_lea.vmem %s8, %s603
        %p605 = pneg %p249
        %p606 = pneg %p246
        %s607 = sand.u32 %s30, 1
        %s608 = scalar_lea.sflag [#allocation6], %s607
        %s609 = sand.u32 %s262, 1
        %s610 = scalar_lea.vmem [#allocation5], %s609
        %p611 = pneg %p275
        %p612 = pneg %p272
        %p613 = scmp.lt.s32.totalorder %s30, 1
        %s614 = scalar_select %p613, %s30, 1
        %s615 = smul.addr %s614, 4
        %s616 = smul.addr %s615, 4
        %s617 = scalar_lea.vmem %s10, %s616
        %p618 = pneg %p301
        %p619 = pneg %p298
        %s620 = sand.u32 %s30, 1
        %s621 = scalar_lea.sflag [#allocation6], %s620
        %s622 = sand.u32 %s314, 1
        %s623 = scalar_lea.vmem [#allocation7], %s622
        %p624 = pneg %p327
        %p625 = pneg %p324
        %p626 = scmp.lt.s32.totalorder %s30, 1
        %s627 = scalar_select %p626, %s30, 1
        %s628 = smul.addr %s627, 8
        %s629 = smul.addr %s628, 4
        %s630 = scalar_lea.vmem %s12, %s629
        %p631 = pneg %p353
        %p632 = pneg %p350
        %p633 = scmp.lt.s32.totalorder %s30, 1
        %s634 = scalar_select %p633, %s30, 1
        %s635 = scalar_lea.vmem %s13, %s634
        %p636 = pneg %p379
        %p637 = pneg %p376
        %p638 = pneg %p400
        %p639 = pneg %p397
        %p640 = scmp.lt.s32.totalorder %s30, 1
        %s641 = scalar_select %p640, %s30, 1
        %s642 = scalar_lea.vmem %s2, %s641
        %p643 = scmp.lt.s32.totalorder %s30, 1
        %s644 = scalar_select %p643, %s30, 1
        %s645 = scalar_lea.vmem %s3, %s644
        %p646 = scmp.lt.s32.totalorder %s30, 1
        %s647 = scalar_select %p646, %s30, 1
        %s648 = smul.addr %s647, 4
        %s649 = smul.addr %s648, 4
        %s650 = scalar_lea.vmem %s4, %s649
        %p651 = scmp.lt.s32.totalorder %s30, 1
        %s652 = scalar_select %p651, %s30, 1
        %s653 = scalar_lea.vmem %s5, %s652
        %p654 = scmp.lt.s32.totalorder %s30, 1
        %s655 = scalar_select %p654, %s30, 1
        %s656 = smul.addr %s655, 4
        %s657 = smul.addr %s656, 4
        %s658 = scalar_lea.vmem %s6, %s657
        %p659 = scmp.lt.s32.totalorder %s30, 1
        %s660 = scalar_select %p659, %s30, 1
        %s661 = scalar_lea.vmem %s7, %s660
        %p662 = scmp.lt.s32.totalorder %s30, 1
        %s663 = scalar_select %p662, %s30, 1
        %s664 = scalar_lea.vmem %s8, %s663
        %p665 = scmp.lt.s32.totalorder %s30, 1
        %s666 = scalar_select %p665, %s30, 1
        %s667 = smul.addr %s666, 4
        %s668 = smul.addr %s667, 4
        %s669 = scalar_lea.vmem %s10, %s668
        %p670 = scmp.lt.s32.totalorder %s30, 1
        %s671 = scalar_select %p670, %s30, 1
        %s672 = smul.addr %s671, 8
        %s673 = smul.addr %s672, 4
        %s674 = scalar_lea.vmem %s12, %s673
        %p675 = scmp.lt.s32.totalorder %s30, 1
        %s676 = scalar_select %p675, %s30, 1
        %s677 = scalar_lea.vmem %s13, %s676
        %p679 = scmp.eq.s32.totalorder %s30, 0
        // Predicated region
        $region89: #{tpu_custom_call.1} parent=75 // pred_check
          %p680 = pneg %p679
        $region90: #{tpu_custom_call.1} parent=75 // pred_check_branch
          %682 = sbr.rel (%p680) target = $region92
        $region91: #{tpu_custom_call.1} parent=75 // pred_region
          %v683 = vld [vmem:[#allocation2] sm:$0xff]
          %v684 = vld [vmem:[#allocation2 + $0x8] sm:$0xff]
          %vm685 = vcmask 261120
          %686 = vst.msk [vmem:[#allocation8] sm:$0xff] %vm685, %v683
          %687 = vst.msk [vmem:[#allocation8 + $0x8] sm:$0xff] %vm685, %v684
        $region92: #{tpu_custom_call.1} parent=75 // pred_fallthru
          _
        %v688 = vld [vmem:[#allocation8] sm:$0xff]
        %v689 = vld [vmem:[#allocation8 + $0x8] sm:$0xff]
        %v690 = vld [vmem:[%s1] sm:$0x3]
        %v691 = vld [vmem:[%s642] sm:$0x1]
        %v692 = vld [vmem:[%s645] sm:$0x1]
        %vm693 = vcmask 261120
        %v694 = vsel %vm693, %v688, 0.0
        %695 = vadd.xlane.f32.xlu0 %v694
        %v696 = vpop.xlane.xlu0 %695
        %v697 = vsel %vm693, %v689, 0.0
        %698 = vadd.xlane.f32.xlu0 %v697
        %v699 = vpop.xlane.xlu0 %698
        %v700 = vrcp.pop 32.0
        %v701 = vmul.f32 %v696, %v700
        %v702 = vmul.f32 %v699, %v700
        %v703 = vsub.f32 %v688, %v701
        %v704 = vsub.f32 %v689, %v702
        %v705 = vmul.f32 %v703, %v703
        %v706 = vmul.f32 %v704, %v704
        %v707 = vsel %vm693, %v705, 0.0
        %708 = vadd.xlane.f32.xlu0 %v707
        %v709 = vpop.xlane.xlu0 %708
        %v710 = vsel %vm693, %v706, 0.0
        %711 = vadd.xlane.f32.xlu0 %v710
        %v712 = vpop.xlane.xlu0 %711
        %v713 = vmul.f32 %v709, %v700
        %v714 = vmul.f32 %v712, %v700
        %v715 = vadd.f32 %v713, 1e-05
        %v716 = vadd.f32 %v714, 1e-05
        %v717 = vrsqrt.pop %v715
        %v718 = vrsqrt.pop %v716
        %v719 = vmul.f32 %v703, %v717
        %v720 = vmul.f32 %v704, %v718
        %v722 = vlaneseq
        %v723 = vshrl.u32 %v722, 7
        %v724 = vsub.s32 0, %v723
        %v725 = vrot.slane %v691, %v724
        %v727 = vmul.f32 %v719, %v725
        %v728 = vmul.f32 %v720, %v725
        %v730 = vlaneseq
        %v731 = vshrl.u32 %v730, 7
        %v732 = vsub.s32 0, %v731
        %v733 = vrot.slane %v692, %v732
        %v735 = vadd.f32 %v727, %v733
        %v736 = vadd.f32 %v728, %v733
        %v737 = vpack.c.bf16 %v736, %v735
        %v738 = vld [vmem:[%s650] sm:$0xf]
        %v739 = vld [vmem:[%s650 + $0x4] sm:$0xf]
        %v740 = vld [vmem:[%s650 + $0x8] sm:$0xf]
        %v741 = vld [vmem:[%s650 + $0xc] sm:$0xf]
        %v742 = vld [vmem:[%s653] sm:$0x1]
        %v744 = vlaneseq
        %v745 = vshrl.u32 %v744, 7
        %v746 = vsub.s32 0, %v745
        %v747 = vrot.slane %v742, %v746
        %v753 = vunpack.c.l.b16 %v738
        %v754 = vunpack.c.l.b16 %v739
        %v755 = vunpack.c.l.b16 %v740
        %v756 = vunpack.c.l.b16 %v741
        %v757 = vpack.c.b16 %v754, %v753
        %v758 = vpack.c.b16 %v756, %v755
        %v762 = vsel %vm693, %v737, 0
        %764 = vmatprep.subr.bf16.mxu0 0
        %765 = vmatpush1.bf16.msra.mxu0 %v757
        %766 = vmatprep.subr.bf16.mxu0 0
        %767 = vmatpush1.bf16.msra.mxu0 %v758
        %768 = vmatprep.subr.bf16.mxu0 0
        %769 = vmatpush1.bf16.msra.mxu0 0
        %770 = vmatprep.subr.bf16.mxu0 0
        %771 = vmatpush1.bf16.msra.mxu0 0
        %772 = vmatprep.subr.bf16.mxu0 0
        %773 = vmatpush1.bf16.msra.mxu0 0
        %774 = vmatprep.subr.bf16.mxu0 0
        %775 = vmatpush1.bf16.msra.mxu0 0
        %776 = vmatprep.subr.bf16.mxu0 0
        %777 = vmatpush1.bf16.msra.mxu0 0
        %778 = vmatprep.subr.bf16.mxu0 0
        %779 = vmatpush1.bf16.msra.mxu0 0
        %780 = vmatprep.subr.bf16.mxu0 0
        %781 = vmatpush1.bf16.msra.mxu0 0
        %782 = vmatprep.subr.bf16.mxu0 0
        %783 = vmatpush1.bf16.msra.mxu0 0
        %784 = vmatprep.subr.bf16.mxu0 0
        %785 = vmatpush1.bf16.msra.mxu0 0
        %786 = vmatprep.subr.bf16.mxu0 0
        %787 = vmatpush1.bf16.msra.mxu0 0
        %788 = vmatprep.subr.bf16.mxu0 0
        %789 = vmatpush1.bf16.msra.mxu0 0
        %790 = vmatprep.subr.bf16.mxu0 0
        %791 = vmatpush1.bf16.msra.mxu0 0
        %792 = vmatprep.subr.bf16.mxu0 0
        %793 = vmatpush1.bf16.msra.mxu0 0
        %794 = vmatprep.subr.bf16.mxu0 0
        %795 = vmatpush1.bf16.msra.mxu0 0
        %796 = vmatprep.mubr.bf16.mxu0 0
        %797 = vmatmul.mubr.bf16.gmra.mrb[0].mxu0 %v762
        %v798 = vpop.f32.mrb[0].mxu0
        %v799 = vadd.f32 %v747, %v798
        %v800 = vpop.f32.mrb[0].mxu0
        %v801 = vpop.f32.mrb[0].mxu0
        %v802 = vadd.f32 %v747, %v801
        %v803 = vpop.f32.mrb[0].mxu0
        %804 = vdwg.mxu0
        %v805 = vpack.c.bf16 %v799, %v799
        %v806 = vpack.c.bf16 %v802, %v802
        %808 = vrot.lane.b32.xlu0 %v805, 96
        %v809 = vpop.permute.xlu0 %808
        %vm810 = vcmask 64512
        %v812 = vsel %vm810, %v805, 0
        %v815 = vsel %vm810, %v809, 0
        %817 = vmatprep.subr.bf16.mxu0 0
        %818 = vmatpush1.bf16.xpose.msra.mxu0 %v815
        %819 = vmatprep.subr.bf16.mxu0 0
        %820 = vmatpush1.bf16.xpose.msra.mxu0 0
        %821 = vmatprep.subr.bf16.mxu0 0
        %822 = vmatpush1.bf16.xpose.msra.mxu0 0
        %823 = vmatprep.subr.bf16.mxu0 0
        %824 = vmatpush1.bf16.xpose.msra.mxu0 0
        %825 = vmatprep.subr.bf16.mxu0 0
        %826 = vmatpush1.bf16.xpose.msra.mxu0 0
        %827 = vmatprep.subr.bf16.mxu0 0
        %828 = vmatpush1.bf16.xpose.msra.mxu0 0
        %829 = vmatprep.subr.bf16.mxu0 0
        %830 = vmatpush1.bf16.xpose.msra.mxu0 0
        %831 = vmatprep.subr.bf16.mxu0 0
        %832 = vmatpush1.bf16.xpose.msra.mxu0 0
        %833 = vmatprep.subr.bf16.mxu0 0
        %834 = vmatpush1.bf16.xpose.msra.mxu0 0
        %835 = vmatprep.subr.bf16.mxu0 0
        %836 = vmatpush1.bf16.xpose.msra.mxu0 0
        %837 = vmatprep.subr.bf16.mxu0 0
        %838 = vmatpush1.bf16.xpose.msra.mxu0 0
        %839 = vmatprep.subr.bf16.mxu0 0
        %840 = vmatpush1.bf16.xpose.msra.mxu0 0
        %841 = vmatprep.subr.bf16.mxu0 0
        %842 = vmatpush1.bf16.xpose.msra.mxu0 0
        %843 = vmatprep.subr.bf16.mxu0 0
        %844 = vmatpush1.bf16.xpose.msra.mxu0 0
        %845 = vmatprep.subr.bf16.mxu0 0
        %846 = vmatpush1.bf16.xpose.msra.mxu0 0
        %847 = vmatprep.subr.bf16.mxu0 0
        %848 = vmatpush1.bf16.xpose.msra.mxu0 0
        %849 = vmatprep.mubr.bf16.mxu0 0
        %850 = vmatmul.mubr.bf16.gmra.mrb[0].mxu0 %v812
        %v851 = vpop.f32.mrb[0].mxu0
        %v852 = vadd.f32 0.0, %v851
        %v853 = vpop.f32.mrb[0].mxu0
        %v854 = vpop.f32.mrb[0].mxu0
        %v855 = vpop.f32.mrb[0].mxu0
        %856 = vdwg.mxu0
        %858 = vrot.lane.b32.xlu0 %v806, 96
        %v859 = vpop.permute.xlu0 %858
        %v861 = vsel %vm810, %v806, 0
        %v864 = vsel %vm810, %v859, 0
        %866 = vmatprep.subr.bf16.mxu0 0
        %867 = vmatpush1.bf16.xpose.msra.mxu0 %v864
        %868 = vmatprep.subr.bf16.mxu0 0
        %869 = vmatpush1.bf16.xpose.msra.mxu0 0
        %870 = vmatprep.subr.bf16.mxu0 0
        %871 = vmatpush1.bf16.xpose.msra.mxu0 0
        %872 = vmatprep.subr.bf16.mxu0 0
        %873 = vmatpush1.bf16.xpose.msra.mxu0 0
        %874 = vmatprep.subr.bf16.mxu0 0
        %875 = vmatpush1.bf16.xpose.msra.mxu0 0
        %876 = vmatprep.subr.bf16.mxu0 0
        %877 = vmatpush1.bf16.xpose.msra.mxu0 0
        %878 = vmatprep.subr.bf16.mxu0 0
        %879 = vmatpush1.bf16.xpose.msra.mxu0 0
        %880 = vmatprep.subr.bf16.mxu0 0
        %881 = vmatpush1.bf16.xpose.msra.mxu0 0
        %882 = vmatprep.subr.bf16.mxu0 0
        %883 = vmatpush1.bf16.xpose.msra.mxu0 0
        %884 = vmatprep.subr.bf16.mxu0 0
        %885 = vmatpush1.bf16.xpose.msra.mxu0 0
        %886 = vmatprep.subr.bf16.mxu0 0
        %887 = vmatpush1.bf16.xpose.msra.mxu0 0
        %888 = vmatprep.subr.bf16.mxu0 0
        %889 = vmatpush1.bf16.xpose.msra.mxu0 0
        %890 = vmatprep.subr.bf16.mxu0 0
        %891 = vmatpush1.bf16.xpose.msra.mxu0 0
        %892 = vmatprep.subr.bf16.mxu0 0
        %893 = vmatpush1.bf16.xpose.msra.mxu0 0
        %894 = vmatprep.subr.bf16.mxu0 0
        %895 = vmatpush1.bf16.xpose.msra.mxu0 0
        %896 = vmatprep.subr.bf16.mxu0 0
        %897 = vmatpush1.bf16.xpose.msra.mxu0 0
        %898 = vmatprep.mubr.bf16.mxu0 0
        %899 = vmatmul.mubr.bf16.gmra.mrb[0].mxu0 %v861
        %v900 = vpop.f32.mrb[0].mxu0
        %v901 = vadd.f32 0.0, %v900
        %v902 = vpop.f32.mrb[0].mxu0
        %v903 = vpop.f32.mrb[0].mxu0
        %v904 = vpop.f32.mrb[0].mxu0
        %905 = vdwg.mxu0
        %v906 = vmul.f32 %v852, 0.35355338
        %v907 = vmul.f32 %v901, 0.35355338
        %v910 = vunpack.c.l.s4 1966171168
        %v911 = vunpack.c.0.s8 %v910
        %v912 = vlaneseq
        %v913 = vshrl.u32 %v912, 7
        %v914 = vsub.s32 %v911, %v913
        %v915 = vrot.slane %v690, %v914
        %v916 = vcombine.high %v915, %v915
        %v918 = vunpack.c.l.s4 1966171168
        %v919 = vunpack.c.0.s8 %v918
        %v920 = vlaneseq
        %v921 = vshrl.u32 %v920, 7
        %v922 = vsub.s32 %v919, %v921
        %v923 = vrot.slane %v915, %v922
        %v925 = vunpack.c.l.s4 1966171168
        %v926 = vunpack.c.0.s8 %v925
        %v927 = vlaneseq
        %v928 = vshrl.u32 %v927, 7
        %v929 = vsub.s32 %v926, %v928
        %v930 = vrot.slane %v916, %v929
        %v931 = vlaneseq
        %v932 = vshrl.u32 %v931, 7
        %v933 = vsub.s32 0, %v932
        %v934 = vrot.slane %v923, %v933
        %v935 = vlaneseq
        %v936 = vshrl.u32 %v935, 7
        %v937 = vsub.s32 0, %v936
        %v938 = vrot.slane %v930, %v937
        %v941 = vadd.f32 %v906, %v934
        %v942 = vadd.f32 %v907, %v938
        %v943 = vsel %vm810, %v941, -inf
        %944 = vmax.xlane.f32.xlu0 %v943
        %v945 = vpop.xlane.xlu0 %944
        %v946 = vsel %vm810, %v942, -inf
        %947 = vmax.xlane.f32.xlu0 %v946
        %v948 = vpop.xlane.xlu0 %947
        %v949 = vsub.f32 %v941, %v945
        %v950 = vsub.f32 %v942, %v948
        %v951 = vmul.f32 %v949, 1.442695
        %v952 = vpow.pop %v951
        %v953 = vmul.f32 %v950, 1.442695
        %v954 = vpow.pop %v953
        %v955 = vsel %vm810, %v952, 0.0
        %956 = vadd.xlane.f32.xlu0 %v955
        %v957 = vpop.xlane.xlu0 %956
        %v958 = vsel %vm810, %v954, 0.0
        %959 = vadd.xlane.f32.xlu0 %v958
        %v960 = vpop.xlane.xlu0 %959
        %v961 = vrcp.pop %v957
        %v962 = vrcp.pop %v960
        %v963 = vmul.f32 %v952, %v961
        %v964 = vmul.f32 %v954, %v962
        %v965 = vpack.c.bf16 %v963, %v963
        %v966 = vpack.c.bf16 %v964, %v964
        %967 = vrot.lane.b32.xlu0 %v805, 64
        %v968 = vpop.permute.xlu0 %967
        %v970 = vsel %vm810, %v965, 0
        %vm972 = vcmask 1043456
        %v974 = vsel %vm972, %v968, 0
        %976 = vmatprep.subr.bf16.mxu0 0
        %977 = vmatpush1.bf16.msra.mxu0 %v974
        %978 = vmatprep.subr.bf16.mxu0 0
        %979 = vmatpush1.bf16.msra.mxu0 0
        %980 = vmatprep.subr.bf16.mxu0 0
        %981 = vmatpush1.bf16.msra.mxu0 0
        %982 = vmatprep.subr.bf16.mxu0 0
        %983 = vmatpush1.bf16.msra.mxu0 0
        %984 = vmatprep.subr.bf16.mxu0 0
        %985 = vmatpush1.bf16.msra.mxu0 0
        %986 = vmatprep.subr.bf16.mxu0 0
        %987 = vmatpush1.bf16.msra.mxu0 0
        %988 = vmatprep.subr.bf16.mxu0 0
        %989 = vmatpush1.bf16.msra.mxu0 0
        %990 = vmatprep.subr.bf16.mxu0 0
        %991 = vmatpush1.bf16.msra.mxu0 0
        %992 = vmatprep.subr.bf16.mxu0 0
        %993 = vmatpush1.bf16.msra.mxu0 0
        %994 = vmatprep.subr.bf16.mxu0 0
        %995 = vmatpush1.bf16.msra.mxu0 0
        %996 = vmatprep.subr.bf16.mxu0 0
        %997 = vmatpush1.bf16.msra.mxu0 0
        %998 = vmatprep.subr.bf16.mxu0 0
        %999 = vmatpush1.bf16.msra.mxu0 0
        %1000 = vmatprep.subr.bf16.mxu0 0
        %1001 = vmatpush1.bf16.msra.mxu0 0
        %1002 = vmatprep.subr.bf16.mxu0 0
        %1003 = vmatpush1.bf16.msra.mxu0 0
        %1004 = vmatprep.subr.bf16.mxu0 0
        %1005 = vmatpush1.bf16.msra.mxu0 0
        %1006 = vmatprep.subr.bf16.mxu0 0
        %1007 = vmatpush1.bf16.msra.mxu0 0
        %1008 = vmatprep.mubr.bf16.mxu0 0
        %1009 = vmatmul.mubr.bf16.gmra.mrb[0].mxu0 %v970
        %v1010 = vpop.f32.mrb[0].mxu0
        %v1011 = vadd.f32 0.0, %v1010
        %v1012 = vpop.f32.mrb[0].mxu0
        %v1013 = vpop.f32.mrb[0].mxu0
        %v1014 = vpop.f32.mrb[0].mxu0
        %1015 = vdwg.mxu0
        %1016 = vrot.lane.b32.xlu0 %v806, 64
        %v1017 = vpop.permute.xlu0 %1016
        %v1019 = vsel %vm810, %v966, 0
        %v1022 = vsel %vm972, %v1017, 0
        %1024 = vmatprep.subr.bf16.mxu0 0
        %1025 = vmatpush1.bf16.msra.mxu0 %v1022
        %1026 = vmatprep.subr.bf16.mxu0 0
        %1027 = vmatpush1.bf16.msra.mxu0 0
        %1028 = vmatprep.subr.bf16.mxu0 0
        %1029 = vmatpush1.bf16.msra.mxu0 0
        %1030 = vmatprep.subr.bf16.mxu0 0
        %1031 = vmatpush1.bf16.msra.mxu0 0
        %1032 = vmatprep.subr.bf16.mxu0 0
        %1033 = vmatpush1.bf16.msra.mxu0 0
        %1034 = vmatprep.subr.bf16.mxu0 0
        %1035 = vmatpush1.bf16.msra.mxu0 0
        %1036 = vmatprep.subr.bf16.mxu0 0
        %1037 = vmatpush1.bf16.msra.mxu0 0
        %1038 = vmatprep.subr.bf16.mxu0 0
        %1039 = vmatpush1.bf16.msra.mxu0 0
        %1040 = vmatprep.subr.bf16.mxu0 0
        %1041 = vmatpush1.bf16.msra.mxu0 0
        %1042 = vmatprep.subr.bf16.mxu0 0
        %1043 = vmatpush1.bf16.msra.mxu0 0
        %1044 = vmatprep.subr.bf16.mxu0 0
        %1045 = vmatpush1.bf16.msra.mxu0 0
        %1046 = vmatprep.subr.bf16.mxu0 0
        %1047 = vmatpush1.bf16.msra.mxu0 0
        %1048 = vmatprep.subr.bf16.mxu0 0
        %1049 = vmatpush1.bf16.msra.mxu0 0
        %1050 = vmatprep.subr.bf16.mxu0 0
        %1051 = vmatpush1.bf16.msra.mxu0 0
        %1052 = vmatprep.subr.bf16.mxu0 0
        %1053 = vmatpush1.bf16.msra.mxu0 0
        %1054 = vmatprep.subr.bf16.mxu0 0
        %1055 = vmatpush1.bf16.msra.mxu0 0
        %1056 = vmatprep.mubr.bf16.mxu0 0
        %1057 = vmatmul.mubr.bf16.gmra.mrb[0].mxu0 %v1019
        %v1058 = vpop.f32.mrb[0].mxu0
        %v1059 = vadd.f32 0.0, %v1058
        %v1060 = vpop.f32.mrb[0].mxu0
        %v1061 = vpop.f32.mrb[0].mxu0
        %v1062 = vpop.f32.mrb[0].mxu0
        %1063 = vdwg.mxu0
        %1064 = vrot.lane.b32.xlu0 %v805, 120
        %v1065 = vpop.permute.xlu0 %1064
        %1066 = vrot.lane.b32.xlu0 %v805, 88
        %v1067 = vpop.permute.xlu0 %1066
        %v1069 = vsel %vm810, %v1065, 0
        %v1072 = vsel %vm810, %v1067, 0
        %1074 = vmatprep.subr.bf16.mxu0 0
        %1075 = vmatpush1.bf16.xpose.msra.mxu0 %v1072
        %1076 = vmatprep.subr.bf16.mxu0 0
        %1077 = vmatpush1.bf16.xpose.msra.mxu0 0
        %1078 = vmatprep.subr.bf16.mxu0 0
        %1079 = vmatpush1.bf16.xpose.msra.mxu0 0
        %1080 = vmatprep.subr.bf16.mxu0 0
        %1081 = vmatpush1.bf16.xpose.msra.mxu0 0
        %1082 = vmatprep.subr.bf16.mxu0 0
        %1083 = vmatpush1.bf16.xpose.msra.mxu0 0
        %1084 = vmatprep.subr.bf16.mxu0 0
        %1085 = vmatpush1.bf16.xpose.msra.mxu0 0
        %1086 = vmatprep.subr.bf16.mxu0 0
        %1087 = vmatpush1.bf16.xpose.msra.mxu0 0
        %1088 = vmatprep.subr.bf16.mxu0 0
        %1089 = vmatpush1.bf16.xpose.msra.mxu0 0
        %1090 = vmatprep.subr.bf16.mxu0 0
        %1091 = vmatpush1.bf16.xpose.msra.mxu0 0
        %1092 = vmatprep.subr.bf16.mxu0 0
        %1093 = vmatpush1.bf16.xpose.msra.mxu0 0
        %1094 = vmatprep.subr.bf16.mxu0 0
        %1095 = vmatpush1.bf16.xpose.msra.mxu0 0
        %1096 = vmatprep.subr.bf16.mxu0 0
        %1097 = vmatpush1.bf16.xpose.msra.mxu0 0
        %1098 = vmatprep.subr.bf16.mxu0 0
        %1099 = vmatpush1.bf16.xpose.msra.mxu0 0
        %1100 = vmatprep.subr.bf16.mxu0 0
        %1101 = vmatpush1.bf16.xpose.msra.mxu0 0
        %1102 = vmatprep.subr.bf16.mxu0 0
        %1103 = vmatpush1.bf16.xpose.msra.mxu0 0
        %1104 = vmatprep.subr.bf16.mxu0 0
        %1105 = vmatpush1.bf16.xpose.msra.mxu0 0
        %1106 = vmatprep.mubr.bf16.mxu0 0
        %1107 = vmatmul.mubr.bf16.gmra.mrb[0].mxu0 %v1069
        %v1108 = vpop.f32.mrb[0].mxu0
        %v1109 = vadd.f32 0.0, %v1108
        %v1110 = vpop.f32.mrb[0].mxu0
        %v1111 = vpop.f32.mrb[0].mxu0
        %v1112 = vpop.f32.mrb[0].mxu0
        %1113 = vdwg.mxu0
        %1114 = vrot.lane.b32.xlu0 %v806, 120
        %v1115 = vpop.permute.xlu0 %1114
        %1116 = vrot.lane.b32.xlu0 %v806, 88
        %v1117 = vpop.permute.xlu0 %1116
        %v1119 = vsel %vm810, %v1115, 0
        %v1122 = vsel %vm810, %v1117, 0
        %1124 = vmatprep.subr.bf16.mxu0 0
        %1125 = vmatpush1.bf16.xpose.msra.mxu0 %v1122
        %1126 = vmatprep.subr.bf16.mxu0 0
        %1127 = vmatpush1.bf16.xpose.msra.mxu0 0
        %1128 = vmatprep.subr.bf16.mxu0 0
        %1129 = vmatpush1.bf16.xpose.msra.mxu0 0
        %1130 = vmatprep.subr.bf16.mxu0 0
        %1131 = vmatpush1.bf16.xpose.msra.mxu0 0
        %1132 = vmatprep.subr.bf16.mxu0 0
        %1133 = vmatpush1.bf16.xpose.msra.mxu0 0
        %1134 = vmatprep.subr.bf16.mxu0 0
        %1135 = vmatpush1.bf16.xpose.msra.mxu0 0
        %1136 = vmatprep.subr.bf16.mxu0 0
        %1137 = vmatpush1.bf16.xpose.msra.mxu0 0
        %1138 = vmatprep.subr.bf16.mxu0 0
        %1139 = vmatpush1.bf16.xpose.msra.mxu0 0
        %1140 = vmatprep.subr.bf16.mxu0 0
        %1141 = vmatpush1.bf16.xpose.msra.mxu0 0
        %1142 = vmatprep.subr.bf16.mxu0 0
        %1143 = vmatpush1.bf16.xpose.msra.mxu0 0
        %1144 = vmatprep.subr.bf16.mxu0 0
        %1145 = vmatpush1.bf16.xpose.msra.mxu0 0
        %1146 = vmatprep.subr.bf16.mxu0 0
        %1147 = vmatpush1.bf16.xpose.msra.mxu0 0
        %1148 = vmatprep.subr.bf16.mxu0 0
        %1149 = vmatpush1.bf16.xpose.msra.mxu0 0
        %1150 = vmatprep.subr.bf16.mxu0 0
        %1151 = vmatpush1.bf16.xpose.msra.mxu0 0
        %1152 = vmatprep.subr.bf16.mxu0 0
        %1153 = vmatpush1.bf16.xpose.msra.mxu0 0
        %1154 = vmatprep.subr.bf16.mxu0 0
        %1155 = vmatpush1.bf16.xpose.msra.mxu0 0
        %1156 = vmatprep.mubr.bf16.mxu0 0
        %1157 = vmatmul.mubr.bf16.gmra.mrb[0].mxu0 %v1119
        %v1158 = vpop.f32.mrb[0].mxu0
        %v1159 = vadd.f32 0.0, %v1158
        %v1160 = vpop.f32.mrb[0].mxu0
        %v1161 = vpop.f32.mrb[0].mxu0
        %v1162 = vpop.f32.mrb[0].mxu0
        %1163 = vdwg.mxu0
        %v1164 = vmul.f32 %v1109, 0.35355338
        %v1165 = vmul.f32 %v1159, 0.35355338
        %v1166 = vadd.f32 %v1164, %v934
        %v1167 = vadd.f32 %v1165, %v938
        %v1168 = vsel %vm810, %v1166, -inf
        %1169 = vmax.xlane.f32.xlu0 %v1168
        %v1170 = vpop.xlane.xlu0 %1169
        %v1171 = vsel %vm810, %v1167, -inf
        %1172 = vmax.xlane.f32.xlu0 %v1171
        %v1173 = vpop.xlane.xlu0 %1172
        %v1174 = vsub.f32 %v1166, %v1170
        %v1175 = vsub.f32 %v1167, %v1173
        %v1176 = vmul.f32 %v1174, 1.442695
        %v1177 = vpow.pop %v1176
        %v1178 = vmul.f32 %v1175, 1.442695
        %v1179 = vpow.pop %v1178
        %v1180 = vsel %vm810, %v1177, 0.0
        %1181 = vadd.xlane.f32.xlu0 %v1180
        %v1182 = vpop.xlane.xlu0 %1181
        %v1183 = vsel %vm810, %v1179, 0.0
        %1184 = vadd.xlane.f32.xlu0 %v1183
        %v1185 = vpop.xlane.xlu0 %1184
        %v1186 = vrcp.pop %v1182
        %v1187 = vrcp.pop %v1185
        %v1188 = vmul.f32 %v1177, %v1186
        %v1189 = vmul.f32 %v1179, %v1187
        %v1190 = vpack.c.bf16 %v1188, %v1188
        %v1191 = vpack.c.bf16 %v1189, %v1189
        %1192 = vrot.lane.b32.xlu0 %v805, 56
        %v1193 = vpop.permute.xlu0 %1192
        %v1195 = vsel %vm810, %v1190, 0
        %v1198 = vsel %vm972, %v1193, 0
        %1200 = vmatprep.subr.bf16.mxu0 0
        %1201 = vmatpush1.bf16.msra.mxu0 %v1198
        %1202 = vmatprep.subr.bf16.mxu0 0
        %1203 = vmatpush1.bf16.msra.mxu0 0
        %1204 = vmatprep.subr.bf16.mxu0 0
        %1205 = vmatpush1.bf16.msra.mxu0 0
        %1206 = vmatprep.subr.bf16.mxu0 0
        %1207 = vmatpush1.bf16.msra.mxu0 0
        %1208 = vmatprep.subr.bf16.mxu0 0
        %1209 = vmatpush1.bf16.msra.mxu0 0
        %1210 = vmatprep.subr.bf16.mxu0 0
        %1211 = vmatpush1.bf16.msra.mxu0 0
        %1212 = vmatprep.subr.bf16.mxu0 0
        %1213 = vmatpush1.bf16.msra.mxu0 0
        %1214 = vmatprep.subr.bf16.mxu0 0
        %1215 = vmatpush1.bf16.msra.mxu0 0
        %1216 = vmatprep.subr.bf16.mxu0 0
        %1217 = vmatpush1.bf16.msra.mxu0 0
        %1218 = vmatprep.subr.bf16.mxu0 0
        %1219 = vmatpush1.bf16.msra.mxu0 0
        %1220 = vmatprep.subr.bf16.mxu0 0
        %1221 = vmatpush1.bf16.msra.mxu0 0
        %1222 = vmatprep.subr.bf16.mxu0 0
        %1223 = vmatpush1.bf16.msra.mxu0 0
        %1224 = vmatprep.subr.bf16.mxu0 0
        %1225 = vmatpush1.bf16.msra.mxu0 0
        %1226 = vmatprep.subr.bf16.mxu0 0
        %1227 = vmatpush1.bf16.msra.mxu0 0
        %1228 = vmatprep.subr.bf16.mxu0 0
        %1229 = vmatpush1.bf16.msra.mxu0 0
        %1230 = vmatprep.subr.bf16.mxu0 0
        %1231 = vmatpush1.bf16.msra.mxu0 0
        %1232 = vmatprep.mubr.bf16.mxu0 0
        %1233 = vmatmul.mubr.bf16.gmra.mrb[0].mxu0 %v1195
        %v1234 = vpop.f32.mrb[0].mxu0
        %v1235 = vadd.f32 0.0, %v1234
        %v1236 = vpop.f32.mrb[0].mxu0
        %v1237 = vpop.f32.mrb[0].mxu0
        %v1238 = vpop.f32.mrb[0].mxu0
        %1239 = vdwg.mxu0
        %1240 = vrot.lane.b32.xlu0 %v806, 56
        %v1241 = vpop.permute.xlu0 %1240
        %v1243 = vsel %vm810, %v1191, 0
        %v1246 = vsel %vm972, %v1241, 0
        %1248 = vmatprep.subr.bf16.mxu0 0
        %1249 = vmatpush1.bf16.msra.mxu0 %v1246
        %1250 = vmatprep.subr.bf16.mxu0 0
        %1251 = vmatpush1.bf16.msra.mxu0 0
        %1252 = vmatprep.subr.bf16.mxu0 0
        %1253 = vmatpush1.bf16.msra.mxu0 0
        %1254 = vmatprep.subr.bf16.mxu0 0
        %1255 = vmatpush1.bf16.msra.mxu0 0
        %1256 = vmatprep.subr.bf16.mxu0 0
        %1257 = vmatpush1.bf16.msra.mxu0 0
        %1258 = vmatprep.subr.bf16.mxu0 0
        %1259 = vmatpush1.bf16.msra.mxu0 0
        %1260 = vmatprep.subr.bf16.mxu0 0
        %1261 = vmatpush1.bf16.msra.mxu0 0
        %1262 = vmatprep.subr.bf16.mxu0 0
        %1263 = vmatpush1.bf16.msra.mxu0 0
        %1264 = vmatprep.subr.bf16.mxu0 0
        %1265 = vmatpush1.bf16.msra.mxu0 0
        %1266 = vmatprep.subr.bf16.mxu0 0
        %1267 = vmatpush1.bf16.msra.mxu0 0
        %1268 = vmatprep.subr.bf16.mxu0 0
        %1269 = vmatpush1.bf16.msra.mxu0 0
        %1270 = vmatprep.subr.bf16.mxu0 0
        %1271 = vmatpush1.bf16.msra.mxu0 0
        %1272 = vmatprep.subr.bf16.mxu0 0
        %1273 = vmatpush1.bf16.msra.mxu0 0
        %1274 = vmatprep.subr.bf16.mxu0 0
        %1275 = vmatpush1.bf16.msra.mxu0 0
        %1276 = vmatprep.subr.bf16.mxu0 0
        %1277 = vmatpush1.bf16.msra.mxu0 0
        %1278 = vmatprep.subr.bf16.mxu0 0
        %1279 = vmatpush1.bf16.msra.mxu0 0
        %1280 = vmatprep.mubr.bf16.mxu0 0
        %1281 = vmatmul.mubr.bf16.gmra.mrb[0].mxu0 %v1243
        %v1282 = vpop.f32.mrb[0].mxu0
        %v1283 = vadd.f32 0.0, %v1282
        %v1284 = vpop.f32.mrb[0].mxu0
        %v1285 = vpop.f32.mrb[0].mxu0
        %v1286 = vpop.f32.mrb[0].mxu0
        %1287 = vdwg.mxu0
        %1288 = vrot.lane.b32.xlu0 %v805, 112
        %v1289 = vpop.permute.xlu0 %1288
        %1290 = vrot.lane.b32.xlu0 %v805, 80
        %v1291 = vpop.permute.xlu0 %1290
        %v1293 = vsel %vm810, %v1289, 0
        %v1296 = vsel %vm810, %v1291, 0
        %1298 = vmatprep.subr.bf16.mxu0 0
        %1299 = vmatpush1.bf16.xpose.msra.mxu0 %v1296
        %1300 = vmatprep.subr.bf16.mxu0 0
        %1301 = vmatpush1.bf16.xpose.msra.mxu0 0
        %1302 = vmatprep.subr.bf16.mxu0 0
        %1303 = vmatpush1.bf16.xpose.msra.mxu0 0
        %1304 = vmatprep.subr.bf16.mxu0 0
        %1305 = vmatpush1.bf16.xpose.msra.mxu0 0
        %1306 = vmatprep.subr.bf16.mxu0 0
        %1307 = vmatpush1.bf16.xpose.msra.mxu0 0
        %1308 = vmatprep.subr.bf16.mxu0 0
        %1309 = vmatpush1.bf16.xpose.msra.mxu0 0
        %1310 = vmatprep.subr.bf16.mxu0 0
        %1311 = vmatpush1.bf16.xpose.msra.mxu0 0
        %1312 = vmatprep.subr.bf16.mxu0 0
        %1313 = vmatpush1.bf16.xpose.msra.mxu0 0
        %1314 = vmatprep.subr.bf16.mxu0 0
        %1315 = vmatpush1.bf16.xpose.msra.mxu0 0
        %1316 = vmatprep.subr.bf16.mxu0 0
        %1317 = vmatpush1.bf16.xpose.msra.mxu0 0
        %1318 = vmatprep.subr.bf16.mxu0 0
        %1319 = vmatpush1.bf16.xpose.msra.mxu0 0
        %1320 = vmatprep.subr.bf16.mxu0 0
        %1321 = vmatpush1.bf16.xpose.msra.mxu0 0
        %1322 = vmatprep.subr.bf16.mxu0 0
        %1323 = vmatpush1.bf16.xpose.msra.mxu0 0
        %1324 = vmatprep.subr.bf16.mxu0 0
        %1325 = vmatpush1.bf16.xpose.msra.mxu0 0
        %1326 = vmatprep.subr.bf16.mxu0 0
        %1327 = vmatpush1.bf16.xpose.msra.mxu0 0
        %1328 = vmatprep.subr.bf16.mxu0 0
        %1329 = vmatpush1.bf16.xpose.msra.mxu0 0
        %1330 = vmatprep.mubr.bf16.mxu0 0
        %1331 = vmatmul.mubr.bf16.gmra.mrb[0].mxu0 %v1293
        %v1332 = vpop.f32.mrb[0].mxu0
        %v1333 = vadd.f32 0.0, %v1332
        %v1334 = vpop.f32.mrb[0].mxu0
        %v1335 = vpop.f32.mrb[0].mxu0
        %v1336 = vpop.f32.mrb[0].mxu0
        %1337 = vdwg.mxu0
        %1338 = vrot.lane.b32.xlu0 %v806, 112
        %v1339 = vpop.permute.xlu0 %1338
        %1340 = vrot.lane.b32.xlu0 %v806, 80
        %v1341 = vpop.permute.xlu0 %1340
        %v1343 = vsel %vm810, %v1339, 0
        %v1346 = vsel %vm810, %v1341, 0
        %1348 = vmatprep.subr.bf16.mxu0 0
        %1349 = vmatpush1.bf16.xpose.msra.mxu0 %v1346
        %1350 = vmatprep.subr.bf16.mxu0 0
        %1351 = vmatpush1.bf16.xpose.msra.mxu0 0
        %1352 = vmatprep.subr.bf16.mxu0 0
        %1353 = vmatpush1.bf16.xpose.msra.mxu0 0
        %1354 = vmatprep.subr.bf16.mxu0 0
        %1355 = vmatpush1.bf16.xpose.msra.mxu0 0
        %1356 = vmatprep.subr.bf16.mxu0 0
        %1357 = vmatpush1.bf16.xpose.msra.mxu0 0
        %1358 = vmatprep.subr.bf16.mxu0 0
        %1359 = vmatpush1.bf16.xpose.msra.mxu0 0
        %1360 = vmatprep.subr.bf16.mxu0 0
        %1361 = vmatpush1.bf16.xpose.msra.mxu0 0
        %1362 = vmatprep.subr.bf16.mxu0 0
        %1363 = vmatpush1.bf16.xpose.msra.mxu0 0
        %1364 = vmatprep.subr.bf16.mxu0 0
        %1365 = vmatpush1.bf16.xpose.msra.mxu0 0
        %1366 = vmatprep.subr.bf16.mxu0 0
        %1367 = vmatpush1.bf16.xpose.msra.mxu0 0
        %1368 = vmatprep.subr.bf16.mxu0 0
        %1369 = vmatpush1.bf16.xpose.msra.mxu0 0
        %1370 = vmatprep.subr.bf16.mxu0 0
        %1371 = vmatpush1.bf16.xpose.msra.mxu0 0
        %1372 = vmatprep.subr.bf16.mxu0 0
        %1373 = vmatpush1.bf16.xpose.msra.mxu0 0
        %1374 = vmatprep.subr.bf16.mxu0 0
        %1375 = vmatpush1.bf16.xpose.msra.mxu0 0
        %1376 = vmatprep.subr.bf16.mxu0 0
        %1377 = vmatpush1.bf16.xpose.msra.mxu0 0
        %1378 = vmatprep.subr.bf16.mxu0 0
        %1379 = vmatpush1.bf16.xpose.msra.mxu0 0
        %1380 = vmatprep.mubr.bf16.mxu0 0
        %1381 = vmatmul.mubr.bf16.gmra.mrb[0].mxu0 %v1343
        %v1382 = vpop.f32.mrb[0].mxu0
        %v1383 = vadd.f32 0.0, %v1382
        %v1384 = vpop.f32.mrb[0].mxu0
        %v1385 = vpop.f32.mrb[0].mxu0
        %v1386 = vpop.f32.mrb[0].mxu0
        %1387 = vdwg.mxu0
        %v1388 = vmul.f32 %v1333, 0.35355338
        %v1389 = vmul.f32 %v1383, 0.35355338
        %v1390 = vadd.f32 %v1388, %v934
        %v1391 = vadd.f32 %v1389, %v938
        %v1392 = vsel %vm810, %v1390, -inf
        %1393 = vmax.xlane.f32.xlu0 %v1392
        %v1394 = vpop.xlane.xlu0 %1393
        %v1395 = vsel %vm810, %v1391, -inf
        %1396 = vmax.xlane.f32.xlu0 %v1395
        %v1397 = vpop.xlane.xlu0 %1396
        %v1398 = vsub.f32 %v1390, %v1394
        %v1399 = vsub.f32 %v1391, %v1397
        %v1400 = vmul.f32 %v1398, 1.442695
        %v1401 = vpow.pop %v1400
        %v1402 = vmul.f32 %v1399, 1.442695
        %v1403 = vpow.pop %v1402
        %v1404 = vsel %vm810, %v1401, 0.0
        %1405 = vadd.xlane.f32.xlu0 %v1404
        %v1406 = vpop.xlane.xlu0 %1405
        %v1407 = vsel %vm810, %v1403, 0.0
        %1408 = vadd.xlane.f32.xlu0 %v1407
        %v1409 = vpop.xlane.xlu0 %1408
        %v1410 = vrcp.pop %v1406
        %v1411 = vrcp.pop %v1409
        %v1412 = vmul.f32 %v1401, %v1410
        %v1413 = vmul.f32 %v1403, %v1411
        %v1414 = vpack.c.bf16 %v1412, %v1412
        %v1415 = vpack.c.bf16 %v1413, %v1413
        %1416 = vrot.lane.b32.xlu0 %v805, 48
        %v1417 = vpop.permute.xlu0 %1416
        %v1419 = vsel %vm810, %v1414, 0
        %v1422 = vsel %vm972, %v1417, 0
        %1424 = vmatprep.subr.bf16.mxu0 0
        %1425 = vmatpush1.bf16.msra.mxu0 %v1422
        %1426 = vmatprep.subr.bf16.mxu0 0
        %1427 = vmatpush1.bf16.msra.mxu0 0
        %1428 = vmatprep.subr.bf16.mxu0 0
        %1429 = vmatpush1.bf16.msra.mxu0 0
        %1430 = vmatprep.subr.bf16.mxu0 0
        %1431 = vmatpush1.bf16.msra.mxu0 0
        %1432 = vmatprep.subr.bf16.mxu0 0
        %1433 = vmatpush1.bf16.msra.mxu0 0
        %1434 = vmatprep.subr.bf16.mxu0 0
        %1435 = vmatpush1.bf16.msra.mxu0 0
        %1436 = vmatprep.subr.bf16.mxu0 0
        %1437 = vmatpush1.bf16.msra.mxu0 0
        %1438 = vmatprep.subr.bf16.mxu0 0
        %1439 = vmatpush1.bf16.msra.mxu0 0
        %1440 = vmatprep.subr.bf16.mxu0 0
        %1441 = vmatpush1.bf16.msra.mxu0 0
        %1442 = vmatprep.subr.bf16.mxu0 0
        %1443 = vmatpush1.bf16.msra.mxu0 0
        %1444 = vmatprep.subr.bf16.mxu0 0
        %1445 = vmatpush1.bf16.msra.mxu0 0
        %1446 = vmatprep.subr.bf16.mxu0 0
        %1447 = vmatpush1.bf16.msra.mxu0 0
        %1448 = vmatprep.subr.bf16.mxu0 0
        %1449 = vmatpush1.bf16.msra.mxu0 0
        %1450 = vmatprep.subr.bf16.mxu0 0
        %1451 = vmatpush1.bf16.msra.mxu0 0
        %1452 = vmatprep.subr.bf16.mxu0 0
        %1453 = vmatpush1.bf16.msra.mxu0 0
        %1454 = vmatprep.subr.bf16.mxu0 0
        %1455 = vmatpush1.bf16.msra.mxu0 0
        %1456 = vmatprep.mubr.bf16.mxu0 0
        %1457 = vmatmul.mubr.bf16.gmra.mrb[0].mxu0 %v1419
        %v1458 = vpop.f32.mrb[0].mxu0
        %v1459 = vadd.f32 0.0, %v1458
        %v1460 = vpop.f32.mrb[0].mxu0
        %v1461 = vpop.f32.mrb[0].mxu0
        %v1462 = vpop.f32.mrb[0].mxu0
        %1463 = vdwg.mxu0
        %1464 = vrot.lane.b32.xlu0 %v806, 48
        %v1465 = vpop.permute.xlu0 %1464
        %v1467 = vsel %vm810, %v1415, 0
        %v1470 = vsel %vm972, %v1465, 0
        %1472 = vmatprep.subr.bf16.mxu0 0
        %1473 = vmatpush1.bf16.msra.mxu0 %v1470
        %1474 = vmatprep.subr.bf16.mxu0 0
        %1475 = vmatpush1.bf16.msra.mxu0 0
        %1476 = vmatprep.subr.bf16.mxu0 0
        %1477 = vmatpush1.bf16.msra.mxu0 0
        %1478 = vmatprep.subr.bf16.mxu0 0
        %1479 = vmatpush1.bf16.msra.mxu0 0
        %1480 = vmatprep.subr.bf16.mxu0 0
        %1481 = vmatpush1.bf16.msra.mxu0 0
        %1482 = vmatprep.subr.bf16.mxu0 0
        %1483 = vmatpush1.bf16.msra.mxu0 0
        %1484 = vmatprep.subr.bf16.mxu0 0
        %1485 = vmatpush1.bf16.msra.mxu0 0
        %1486 = vmatprep.subr.bf16.mxu0 0
        %1487 = vmatpush1.bf16.msra.mxu0 0
        %1488 = vmatprep.subr.bf16.mxu0 0
        %1489 = vmatpush1.bf16.msra.mxu0 0
        %1490 = vmatprep.subr.bf16.mxu0 0
        %1491 = vmatpush1.bf16.msra.mxu0 0
        %1492 = vmatprep.subr.bf16.mxu0 0
        %1493 = vmatpush1.bf16.msra.mxu0 0
        %1494 = vmatprep.subr.bf16.mxu0 0
        %1495 = vmatpush1.bf16.msra.mxu0 0
        %1496 = vmatprep.subr.bf16.mxu0 0
        %1497 = vmatpush1.bf16.msra.mxu0 0
        %1498 = vmatprep.subr.bf16.mxu0 0
        %1499 = vmatpush1.bf16.msra.mxu0 0
        %1500 = vmatprep.subr.bf16.mxu0 0
        %1501 = vmatpush1.bf16.msra.mxu0 0
        %1502 = vmatprep.subr.bf16.mxu0 0
        %1503 = vmatpush1.bf16.msra.mxu0 0
        %1504 = vmatprep.mubr.bf16.mxu0 0
        %1505 = vmatmul.mubr.bf16.gmra.mrb[0].mxu0 %v1467
        %v1506 = vpop.f32.mrb[0].mxu0
        %v1507 = vadd.f32 0.0, %v1506
        %v1508 = vpop.f32.mrb[0].mxu0
        %v1509 = vpop.f32.mrb[0].mxu0
        %v1510 = vpop.f32.mrb[0].mxu0
        %1511 = vdwg.mxu0
        %1512 = vrot.lane.b32.xlu0 %v805, 104
        %v1513 = vpop.permute.xlu0 %1512
        %1514 = vrot.lane.b32.xlu0 %v805, 72
        %v1515 = vpop.permute.xlu0 %1514
        %v1517 = vsel %vm810, %v1513, 0
        %v1520 = vsel %vm810, %v1515, 0
        %1522 = vmatprep.subr.bf16.mxu0 0
        %1523 = vmatpush1.bf16.xpose.msra.mxu0 %v1520
        %1524 = vmatprep.subr.bf16.mxu0 0
        %1525 = vmatpush1.bf16.xpose.msra.mxu0 0
        %1526 = vmatprep.subr.bf16.mxu0 0
        %1527 = vmatpush1.bf16.xpose.msra.mxu0 0
        %1528 = vmatprep.subr.bf16.mxu0 0
        %1529 = vmatpush1.bf16.xpose.msra.mxu0 0
        %1530 = vmatprep.subr.bf16.mxu0 0
        %1531 = vmatpush1.bf16.xpose.msra.mxu0 0
        %1532 = vmatprep.subr.bf16.mxu0 0
        %1533 = vmatpush1.bf16.xpose.msra.mxu0 0
        %1534 = vmatprep.subr.bf16.mxu0 0
        %1535 = vmatpush1.bf16.xpose.msra.mxu0 0
        %1536 = vmatprep.subr.bf16.mxu0 0
        %1537 = vmatpush1.bf16.xpose.msra.mxu0 0
        %1538 = vmatprep.subr.bf16.mxu0 0
        %1539 = vmatpush1.bf16.xpose.msra.mxu0 0
        %1540 = vmatprep.subr.bf16.mxu0 0
        %1541 = vmatpush1.bf16.xpose.msra.mxu0 0
        %1542 = vmatprep.subr.bf16.mxu0 0
        %1543 = vmatpush1.bf16.xpose.msra.mxu0 0
        %1544 = vmatprep.subr.bf16.mxu0 0
        %1545 = vmatpush1.bf16.xpose.msra.mxu0 0
        %1546 = vmatprep.subr.bf16.mxu0 0
        %1547 = vmatpush1.bf16.xpose.msra.mxu0 0
        %1548 = vmatprep.subr.bf16.mxu0 0
        %1549 = vmatpush1.bf16.xpose.msra.mxu0 0
        %1550 = vmatprep.subr.bf16.mxu0 0
        %1551 = vmatpush1.bf16.xpose.msra.mxu0 0
        %1552 = vmatprep.subr.bf16.mxu0 0
        %1553 = vmatpush1.bf16.xpose.msra.mxu0 0
        %1554 = vmatprep.mubr.bf16.mxu0 0
        %1555 = vmatmul.mubr.bf16.gmra.mrb[0].mxu0 %v1517
        %v1556 = vpop.f32.mrb[0].mxu0
        %v1557 = vadd.f32 0.0, %v1556
        %v1558 = vpop.f32.mrb[0].mxu0
        %v1559 = vpop.f32.mrb[0].mxu0
        %v1560 = vpop.f32.mrb[0].mxu0
        %1561 = vdwg.mxu0
        %1562 = vrot.lane.b32.xlu0 %v806, 104
        %v1563 = vpop.permute.xlu0 %1562
        %1564 = vrot.lane.b32.xlu0 %v806, 72
        %v1565 = vpop.permute.xlu0 %1564
        %v1567 = vsel %vm810, %v1563, 0
        %v1570 = vsel %vm810, %v1565, 0
        %1572 = vmatprep.subr.bf16.mxu0 0
        %1573 = vmatpush1.bf16.xpose.msra.mxu0 %v1570
        %1574 = vmatprep.subr.bf16.mxu0 0
        %1575 = vmatpush1.bf16.xpose.msra.mxu0 0
        %1576 = vmatprep.subr.bf16.mxu0 0
        %1577 = vmatpush1.bf16.xpose.msra.mxu0 0
        %1578 = vmatprep.subr.bf16.mxu0 0
        %1579 = vmatpush1.bf16.xpose.msra.mxu0 0
        %1580 = vmatprep.subr.bf16.mxu0 0
        %1581 = vmatpush1.bf16.xpose.msra.mxu0 0
        %1582 = vmatprep.subr.bf16.mxu0 0
        %1583 = vmatpush1.bf16.xpose.msra.mxu0 0
        %1584 = vmatprep.subr.bf16.mxu0 0
        %1585 = vmatpush1.bf16.xpose.msra.mxu0 0
        %1586 = vmatprep.subr.bf16.mxu0 0
        %1587 = vmatpush1.bf16.xpose.msra.mxu0 0
        %1588 = vmatprep.subr.bf16.mxu0 0
        %1589 = vmatpush1.bf16.xpose.msra.mxu0 0
        %1590 = vmatprep.subr.bf16.mxu0 0
        %1591 = vmatpush1.bf16.xpose.msra.mxu0 0
        %1592 = vmatprep.subr.bf16.mxu0 0
        %1593 = vmatpush1.bf16.xpose.msra.mxu0 0
        %1594 = vmatprep.subr.bf16.mxu0 0
        %1595 = vmatpush1.bf16.xpose.msra.mxu0 0
        %1596 = vmatprep.subr.bf16.mxu0 0
        %1597 = vmatpush1.bf16.xpose.msra.mxu0 0
        %1598 = vmatprep.subr.bf16.mxu0 0
        %1599 = vmatpush1.bf16.xpose.msra.mxu0 0
        %1600 = vmatprep.subr.bf16.mxu0 0
        %1601 = vmatpush1.bf16.xpose.msra.mxu0 0
        %1602 = vmatprep.subr.bf16.mxu0 0
        %1603 = vmatpush1.bf16.xpose.msra.mxu0 0
        %1604 = vmatprep.mubr.bf16.mxu0 0
        %1605 = vmatmul.mubr.bf16.gmra.mrb[0].mxu0 %v1567
        %v1606 = vpop.f32.mrb[0].mxu0
        %v1607 = vadd.f32 0.0, %v1606
        %v1608 = vpop.f32.mrb[0].mxu0
        %v1609 = vpop.f32.mrb[0].mxu0
        %v1610 = vpop.f32.mrb[0].mxu0
        %1611 = vdwg.mxu0
        %v1612 = vmul.f32 %v1557, 0.35355338
        %v1613 = vmul.f32 %v1607, 0.35355338
        %v1614 = vadd.f32 %v1612, %v934
        %v1615 = vadd.f32 %v1613, %v938
        %v1616 = vsel %vm810, %v1614, -inf
        %1617 = vmax.xlane.f32.xlu0 %v1616
        %v1618 = vpop.xlane.xlu0 %1617
        %v1619 = vsel %vm810, %v1615, -inf
        %1620 = vmax.xlane.f32.xlu0 %v1619
        %v1621 = vpop.xlane.xlu0 %1620
        %v1622 = vsub.f32 %v1614, %v1618
        %v1623 = vsub.f32 %v1615, %v1621
        %v1624 = vmul.f32 %v1622, 1.442695
        %v1625 = vpow.pop %v1624
        %v1626 = vmul.f32 %v1623, 1.442695
        %v1627 = vpow.pop %v1626
        %v1628 = vsel %vm810, %v1625, 0.0
        %1629 = vadd.xlane.f32.xlu0 %v1628
        %v1630 = vpop.xlane.xlu0 %1629
        %v1631 = vsel %vm810, %v1627, 0.0
        %1632 = vadd.xlane.f32.xlu0 %v1631
        %v1633 = vpop.xlane.xlu0 %1632
        %v1634 = vrcp.pop %v1630
        %v1635 = vrcp.pop %v1633
        %v1636 = vmul.f32 %v1625, %v1634
        %v1637 = vmul.f32 %v1627, %v1635
        %v1638 = vpack.c.bf16 %v1636, %v1636
        %v1639 = vpack.c.bf16 %v1637, %v1637
        %1640 = vrot.lane.b32.xlu0 %v805, 40
        %v1641 = vpop.permute.xlu0 %1640
        %v1643 = vsel %vm810, %v1638, 0
        %v1646 = vsel %vm972, %v1641, 0
        %1648 = vmatprep.subr.bf16.mxu0 0
        %1649 = vmatpush1.bf16.msra.mxu0 %v1646
        %1650 = vmatprep.subr.bf16.mxu0 0
        %1651 = vmatpush1.bf16.msra.mxu0 0
        %1652 = vmatprep.subr.bf16.mxu0 0
        %1653 = vmatpush1.bf16.msra.mxu0 0
        %1654 = vmatprep.subr.bf16.mxu0 0
        %1655 = vmatpush1.bf16.msra.mxu0 0
        %1656 = vmatprep.subr.bf16.mxu0 0
        %1657 = vmatpush1.bf16.msra.mxu0 0
        %1658 = vmatprep.subr.bf16.mxu0 0
        %1659 = vmatpush1.bf16.msra.mxu0 0
        %1660 = vmatprep.subr.bf16.mxu0 0
        %1661 = vmatpush1.bf16.msra.mxu0 0
        %1662 = vmatprep.subr.bf16.mxu0 0
        %1663 = vmatpush1.bf16.msra.mxu0 0
        %1664 = vmatprep.subr.bf16.mxu0 0
        %1665 = vmatpush1.bf16.msra.mxu0 0
        %1666 = vmatprep.subr.bf16.mxu0 0
        %1667 = vmatpush1.bf16.msra.mxu0 0
        %1668 = vmatprep.subr.bf16.mxu0 0
        %1669 = vmatpush1.bf16.msra.mxu0 0
        %1670 = vmatprep.subr.bf16.mxu0 0
        %1671 = vmatpush1.bf16.msra.mxu0 0
        %1672 = vmatprep.subr.bf16.mxu0 0
        %1673 = vmatpush1.bf16.msra.mxu0 0
        %1674 = vmatprep.subr.bf16.mxu0 0
        %1675 = vmatpush1.bf16.msra.mxu0 0
        %1676 = vmatprep.subr.bf16.mxu0 0
        %1677 = vmatpush1.bf16.msra.mxu0 0
        %1678 = vmatprep.subr.bf16.mxu0 0
        %1679 = vmatpush1.bf16.msra.mxu0 0
        %1680 = vmatprep.mubr.bf16.mxu0 0
        %1681 = vmatmul.mubr.bf16.gmra.mrb[0].mxu0 %v1643
        %v1682 = vpop.f32.mrb[0].mxu0
        %v1683 = vadd.f32 0.0, %v1682
        %v1684 = vpop.f32.mrb[0].mxu0
        %v1685 = vpop.f32.mrb[0].mxu0
        %v1686 = vpop.f32.mrb[0].mxu0
        %1687 = vdwg.mxu0
        %1688 = vrot.lane.b32.xlu0 %v806, 40
        %v1689 = vpop.permute.xlu0 %1688
        %v1691 = vsel %vm810, %v1639, 0
        %v1694 = vsel %vm972, %v1689, 0
        %1696 = vmatprep.subr.bf16.mxu0 0
        %1697 = vmatpush1.bf16.msra.mxu0 %v1694
        %1698 = vmatprep.subr.bf16.mxu0 0
        %1699 = vmatpush1.bf16.msra.mxu0 0
        %1700 = vmatprep.subr.bf16.mxu0 0
        %1701 = vmatpush1.bf16.msra.mxu0 0
        %1702 = vmatprep.subr.bf16.mxu0 0
        %1703 = vmatpush1.bf16.msra.mxu0 0
        %1704 = vmatprep.subr.bf16.mxu0 0
        %1705 = vmatpush1.bf16.msra.mxu0 0
        %1706 = vmatprep.subr.bf16.mxu0 0
        %1707 = vmatpush1.bf16.msra.mxu0 0
        %1708 = vmatprep.subr.bf16.mxu0 0
        %1709 = vmatpush1.bf16.msra.mxu0 0
        %1710 = vmatprep.subr.bf16.mxu0 0
        %1711 = vmatpush1.bf16.msra.mxu0 0
        %1712 = vmatprep.subr.bf16.mxu0 0
        %1713 = vmatpush1.bf16.msra.mxu0 0
        %1714 = vmatprep.subr.bf16.mxu0 0
        %1715 = vmatpush1.bf16.msra.mxu0 0
        %1716 = vmatprep.subr.bf16.mxu0 0
        %1717 = vmatpush1.bf16.msra.mxu0 0
        %1718 = vmatprep.subr.bf16.mxu0 0
        %1719 = vmatpush1.bf16.msra.mxu0 0
        %1720 = vmatprep.subr.bf16.mxu0 0
        %1721 = vmatpush1.bf16.msra.mxu0 0
        %1722 = vmatprep.subr.bf16.mxu0 0
        %1723 = vmatpush1.bf16.msra.mxu0 0
        %1724 = vmatprep.subr.bf16.mxu0 0
        %1725 = vmatpush1.bf16.msra.mxu0 0
        %1726 = vmatprep.subr.bf16.mxu0 0
        %1727 = vmatpush1.bf16.msra.mxu0 0
        %1728 = vmatprep.mubr.bf16.mxu0 0
        %1729 = vmatmul.mubr.bf16.gmra.mrb[0].mxu0 %v1691
        %v1730 = vpop.f32.mrb[0].mxu0
        %v1731 = vadd.f32 0.0, %v1730
        %v1732 = vpop.f32.mrb[0].mxu0
        %v1733 = vpop.f32.mrb[0].mxu0
        %v1734 = vpop.f32.mrb[0].mxu0
        %1735 = vdwg.mxu0
        %1738 = vrot.lane.b32.xlu0 %v1235, 8
        %v1739 = vpop.permute.xlu0 %1738
        %1740 = vrot.lane.b32.xlu0 %v1283, 8
        %v1741 = vpop.permute.xlu0 %1740
        %1746 = vrot.lane.b32.xlu0 %v1459, 16
        %v1747 = vpop.permute.xlu0 %1746
        %1748 = vrot.lane.b32.xlu0 %v1507, 16
        %v1749 = vpop.permute.xlu0 %1748
        %1754 = vrot.lane.b32.xlu0 %v1683, 24
        %v1755 = vpop.permute.xlu0 %1754
        %1756 = vrot.lane.b32.xlu0 %v1731, 24
        %v1757 = vpop.permute.xlu0 %1756
        %v1760 = vsel %vm810, %v1011, %v1739
        %v1761 = vsel %vm810, %v1059, %v1741
        %vm1762 = vcmask 130048
        %v1763 = vsel %vm1762, %v1760, %v1747
        %v1764 = vsel %vm1762, %v1761, %v1749
        %vm1765 = vcmask 195584
        %v1766 = vsel %vm1765, %v1763, %v1755
        %v1767 = vsel %vm1765, %v1764, %v1757
        %v1768 = vpack.c.bf16 %v1767, %v1766
        %v1769 = vld [vmem:[%s658] sm:$0xf]
        %v1770 = vld [vmem:[%s658 + $0x4] sm:$0xf]
        %v1771 = vld [vmem:[%s658 + $0x8] sm:$0xf]
        %v1772 = vld [vmem:[%s658 + $0xc] sm:$0xf]
        %v1773 = vld [vmem:[%s661] sm:$0x1]
        %v1775 = vlaneseq
        %v1776 = vshrl.u32 %v1775, 7
        %v1777 = vsub.s32 0, %v1776
        %v1778 = vrot.slane %v1773, %v1777
        %v1784 = vunpack.c.l.b16 %v1769
        %v1785 = vunpack.c.l.b16 %v1770
        %v1786 = vunpack.c.l.b16 %v1771
        %v1787 = vunpack.c.l.b16 %v1772
        %v1788 = vpack.c.b16 %v1785, %v1784
        %v1789 = vpack.c.b16 %v1787, %v1786
        %v1793 = vsel %vm693, %v1768, 0
        %1795 = vmatprep.subr.bf16.mxu0 0
        %1796 = vmatpush1.bf16.msra.mxu0 %v1788
        %1797 = vmatprep.subr.bf16.mxu0 0
        %1798 = vmatpush1.bf16.msra.mxu0 %v1789
        %1799 = vmatprep.subr.bf16.mxu0 0
        %1800 = vmatpush1.bf16.msra.mxu0 0
        %1801 = vmatprep.subr.bf16.mxu0 0
        %1802 = vmatpush1.bf16.msra.mxu0 0
        %1803 = vmatprep.subr.bf16.mxu0 0
        %1804 = vmatpush1.bf16.msra.mxu0 0
        %1805 = vmatprep.subr.bf16.mxu0 0
        %1806 = vmatpush1.bf16.msra.mxu0 0
        %1807 = vmatprep.subr.bf16.mxu0 0
        %1808 = vmatpush1.bf16.msra.mxu0 0
        %1809 = vmatprep.subr.bf16.mxu0 0
        %1810 = vmatpush1.bf16.msra.mxu0 0
        %1811 = vmatprep.subr.bf16.mxu0 0
        %1812 = vmatpush1.bf16.msra.mxu0 0
        %1813 = vmatprep.subr.bf16.mxu0 0
        %1814 = vmatpush1.bf16.msra.mxu0 0
        %1815 = vmatprep.subr.bf16.mxu0 0
        %1816 = vmatpush1.bf16.msra.mxu0 0
        %1817 = vmatprep.subr.bf16.mxu0 0
        %1818 = vmatpush1.bf16.msra.mxu0 0
        %1819 = vmatprep.subr.bf16.mxu0 0
        %1820 = vmatpush1.bf16.msra.mxu0 0
        %1821 = vmatprep.subr.bf16.mxu0 0
        %1822 = vmatpush1.bf16.msra.mxu0 0
        %1823 = vmatprep.subr.bf16.mxu0 0
        %1824 = vmatpush1.bf16.msra.mxu0 0
        %1825 = vmatprep.subr.bf16.mxu0 0
        %1826 = vmatpush1.bf16.msra.mxu0 0
        %1827 = vmatprep.mubr.bf16.mxu0 0
        %1828 = vmatmul.mubr.bf16.gmra.mrb[0].mxu0 %v1793
        %v1829 = vpop.f32.mrb[0].mxu0
        %v1830 = vadd.f32 %v1778, %v1829
        %v1831 = vpop.f32.mrb[0].mxu0
        %v1832 = vpop.f32.mrb[0].mxu0
        %v1833 = vadd.f32 %v1778, %v1832
        %v1834 = vpop.f32.mrb[0].mxu0
        %1835 = vdwg.mxu0
        %v1836 = vadd.f32 %v688, %v1830
        %v1837 = vadd.f32 %v689, %v1833
        %v1838 = vld [vmem:[%s664] sm:$0x1]
        %v1839 = vld [vmem:[%s551] sm:$0x1]
        %v1840 = vsel %vm693, %v1836, 0.0
        %1841 = vadd.xlane.f32.xlu0 %v1840
        %v1842 = vpop.xlane.xlu0 %1841
        %v1843 = vsel %vm693, %v1837, 0.0
        %1844 = vadd.xlane.f32.xlu0 %v1843
        %v1845 = vpop.xlane.xlu0 %1844
        %v1846 = vmul.f32 %v1842, %v700
        %v1847 = vmul.f32 %v1845, %v700
        %v1848 = vsub.f32 %v1836, %v1846
        %v1849 = vsub.f32 %v1837, %v1847
        %v1850 = vmul.f32 %v1848, %v1848
        %v1851 = vmul.f32 %v1849, %v1849
        %v1852 = vsel %vm693, %v1850, 0.0
        %1853 = vadd.xlane.f32.xlu0 %v1852
        %v1854 = vpop.xlane.xlu0 %1853
        %v1855 = vsel %vm693, %v1851, 0.0
        %1856 = vadd.xlane.f32.xlu0 %v1855
        %v1857 = vpop.xlane.xlu0 %1856
        %v1858 = vmul.f32 %v1854, %v700
        %v1859 = vmul.f32 %v1857, %v700
        %v1860 = vadd.f32 %v1858, 1e-05
        %v1861 = vadd.f32 %v1859, 1e-05
        %v1862 = vrsqrt.pop %v1860
        %v1863 = vrsqrt.pop %v1861
        %v1864 = vmul.f32 %v1848, %v1862
        %v1865 = vmul.f32 %v1849, %v1863
        %v1867 = vlaneseq
        %v1868 = vshrl.u32 %v1867, 7
        %v1869 = vsub.s32 0, %v1868
        %v1870 = vrot.slane %v1838, %v1869
        %v1872 = vmul.f32 %v1864, %v1870
        %v1873 = vmul.f32 %v1865, %v1870
        %v1875 = vlaneseq
        %v1876 = vshrl.u32 %v1875, 7
        %v1877 = vsub.s32 0, %v1876
        %v1878 = vrot.slane %v1839, %v1877
        %v1880 = vadd.f32 %v1872, %v1878
        %v1881 = vadd.f32 %v1873, %v1878
        %v1882 = vpack.c.bf16 %v1881, %v1880
        %v1883 = vld [vmem:[%s669] sm:$0xf]
        %v1884 = vld [vmem:[%s669 + $0x4] sm:$0xf]
        %v1885 = vld [vmem:[%s669 + $0x8] sm:$0xf]
        %v1886 = vld [vmem:[%s669 + $0xc] sm:$0xf]
        %v1887 = vld [vmem:[%s559] sm:$0x1]
        %v1889 = vlaneseq
        %v1890 = vshrl.u32 %v1889, 7
        %v1891 = vsub.s32 0, %v1890
        %v1892 = vrot.slane %v1887, %v1891
        %v1898 = vunpack.c.l.b16 %v1883
        %v1899 = vunpack.c.l.b16 %v1884
        %v1900 = vunpack.c.l.b16 %v1885
        %v1901 = vunpack.c.l.b16 %v1886
        %v1902 = vpack.c.b16 %v1899, %v1898
        %v1903 = vpack.c.b16 %v1901, %v1900
        %v1907 = vsel %vm693, %v1882, 0
        %1909 = vmatprep.subr.bf16.mxu0 0
        %1910 = vmatpush1.bf16.msra.mxu0 %v1902
        %1911 = vmatprep.subr.bf16.mxu0 0
        %1912 = vmatpush1.bf16.msra.mxu0 %v1903
        %1913 = vmatprep.subr.bf16.mxu0 0
        %1914 = vmatpush1.bf16.msra.mxu0 0
        %1915 = vmatprep.subr.bf16.mxu0 0
        %1916 = vmatpush1.bf16.msra.mxu0 0
        %1917 = vmatprep.subr.bf16.mxu0 0
        %1918 = vmatpush1.bf16.msra.mxu0 0
        %1919 = vmatprep.subr.bf16.mxu0 0
        %1920 = vmatpush1.bf16.msra.mxu0 0
        %1921 = vmatprep.subr.bf16.mxu0 0
        %1922 = vmatpush1.bf16.msra.mxu0 0
        %1923 = vmatprep.subr.bf16.mxu0 0
        %1924 = vmatpush1.bf16.msra.mxu0 0
        %1925 = vmatprep.subr.bf16.mxu0 0
        %1926 = vmatpush1.bf16.msra.mxu0 0
        %1927 = vmatprep.subr.bf16.mxu0 0
        %1928 = vmatpush1.bf16.msra.mxu0 0
        %1929 = vmatprep.subr.bf16.mxu0 0
        %1930 = vmatpush1.bf16.msra.mxu0 0
        %1931 = vmatprep.subr.bf16.mxu0 0
        %1932 = vmatpush1.bf16.msra.mxu0 0
        %1933 = vmatprep.subr.bf16.mxu0 0
        %1934 = vmatpush1.bf16.msra.mxu0 0
        %1935 = vmatprep.subr.bf16.mxu0 0
        %1936 = vmatpush1.bf16.msra.mxu0 0
        %1937 = vmatprep.subr.bf16.mxu0 0
        %1938 = vmatpush1.bf16.msra.mxu0 0
        %1939 = vmatprep.subr.bf16.mxu0 0
        %1940 = vmatpush1.bf16.msra.mxu0 0
        %1941 = vmatprep.mubr.bf16.mxu0 0
        %1942 = vmatmul.mubr.bf16.gmra.mrb[0].mxu0 %v1907
        %v1943 = vpop.f32.mrb[0].mxu0
        %v1944 = vadd.f32 %v1892, %v1943
        %v1945 = vpop.f32.mrb[0].mxu0
        %v1946 = vpop.f32.mrb[0].mxu0
        %v1947 = vadd.f32 %v1892, %v1946
        %v1948 = vpop.f32.mrb[0].mxu0
        %1949 = vdwg.mxu0
        %v1950 = vmax.f32 %v1944, 0.0
        %v1951 = vmax.f32 %v1947, 0.0
        %v1952 = vpack.c.bf16 %v1951, %v1950
        %v1953 = vld [vmem:[%s674] sm:$0xf]
        %v1954 = vld [vmem:[%s674 + $0x4] sm:$0xf]
        %v1955 = vld [vmem:[%s674 + $0x8] sm:$0xf]
        %v1956 = vld [vmem:[%s674 + $0xc] sm:$0xf]
        %v1957 = vld [vmem:[%s674 + $0x10] sm:$0xf]
        %v1958 = vld [vmem:[%s674 + $0x14] sm:$0xf]
        %v1959 = vld [vmem:[%s674 + $0x18] sm:$0xf]
        %v1960 = vld [vmem:[%s674 + $0x1c] sm:$0xf]
        %v1961 = vld [vmem:[%s677] sm:$0x1]
        %v1963 = vlaneseq
        %v1964 = vshrl.u32 %v1963, 7
        %v1965 = vsub.s32 0, %v1964
        %v1966 = vrot.slane %v1961, %v1965
        %v1976 = vunpack.c.l.b16 %v1953
        %v1977 = vunpack.c.l.b16 %v1954
        %v1978 = vunpack.c.l.b16 %v1955
        %v1979 = vunpack.c.l.b16 %v1956
        %v1980 = vunpack.c.l.b16 %v1957
        %v1981 = vunpack.c.l.b16 %v1958
        %v1982 = vunpack.c.l.b16 %v1959
        %v1983 = vunpack.c.l.b16 %v1960
        %v1984 = vpack.c.b16 %v1977, %v1976
        %v1985 = vpack.c.b16 %v1979, %v1978
        %v1986 = vpack.c.b16 %v1981, %v1980
        %v1987 = vpack.c.b16 %v1983, %v1982
        %vm1992 = vcmask 523264
        %v1994 = vsel %vm1992, %v1952, 0
        %1996 = vmatprep.subr.bf16.mxu0 0
        %1997 = vmatpush1.bf16.msra.mxu0 %v1984
        %1998 = vmatprep.subr.bf16.mxu0 0
        %1999 = vmatpush1.bf16.msra.mxu0 %v1985
        %2000 = vmatprep.subr.bf16.mxu0 0
        %2001 = vmatpush1.bf16.msra.mxu0 %v1986
        %2002 = vmatprep.subr.bf16.mxu0 0
        %2003 = vmatpush1.bf16.msra.mxu0 %v1987
        %2004 = vmatprep.subr.bf16.mxu0 0
        %2005 = vmatpush1.bf16.msra.mxu0 0
        %2006 = vmatprep.subr.bf16.mxu0 0
        %2007 = vmatpush1.bf16.msra.mxu0 0
        %2008 = vmatprep.subr.bf16.mxu0 0
        %2009 = vmatpush1.bf16.msra.mxu0 0
        %2010 = vmatprep.subr.bf16.mxu0 0
        %2011 = vmatpush1.bf16.msra.mxu0 0
        %2012 = vmatprep.subr.bf16.mxu0 0
        %2013 = vmatpush1.bf16.msra.mxu0 0
        %2014 = vmatprep.subr.bf16.mxu0 0
        %2015 = vmatpush1.bf16.msra.mxu0 0
        %2016 = vmatprep.subr.bf16.mxu0 0
        %2017 = vmatpush1.bf16.msra.mxu0 0
        %2018 = vmatprep.subr.bf16.mxu0 0
        %2019 = vmatpush1.bf16.msra.mxu0 0
        %2020 = vmatprep.subr.bf16.mxu0 0
        %2021 = vmatpush1.bf16.msra.mxu0 0
        %2022 = vmatprep.subr.bf16.mxu0 0
        %2023 = vmatpush1.bf16.msra.mxu0 0
        %2024 = vmatprep.subr.bf16.mxu0 0
        %2025 = vmatpush1.bf16.msra.mxu0 0
        %2026 = vmatprep.subr.bf16.mxu0 0
        %2027 = vmatpush1.bf16.msra.mxu0 0
        %2028 = vmatprep.mubr.bf16.mxu0 0
        %2029 = vmatmul.mubr.bf16.gmra.mrb[0].mxu0 %v1994
        %v2030 = vpop.f32.mrb[0].mxu0
        %v2031 = vadd.f32 %v1966, %v2030
        %v2032 = vpop.f32.mrb[0].mxu0
        %v2033 = vpop.f32.mrb[0].mxu0
        %v2034 = vadd.f32 %v1966, %v2033
        %v2035 = vpop.f32.mrb[0].mxu0
        %2036 = vdwg.mxu0
        %v2037 = vadd.f32 %v1836, %v2031
        %v2038 = vadd.f32 %v1837, %v2034
        %2039 = vst.msk [vmem:[#allocation8] sm:$0xff] %vm693, %v2037
        %2040 = vst.msk [vmem:[#allocation8 + $0x8] sm:$0xff] %vm693, %v2038
        // Predicated region
        $region93: #{tpu_custom_call.1} parent=75 // pred_check
          %p2041 = pneg %p397
        $region94: #{tpu_custom_call.1} parent=75 // pred_check_branch
          %2043 = sbr.rel (%p2041) target = $region96
        $region95: #{tpu_custom_call.1} parent=75 // pred_region
          %s2045 = ssub.s32 256, 256
          %2046 = vsyncadd [#allocation4], %s2045
          %s2047 = sshll.u32 [#allocation8], 4
          %s2048 = int_to_ptr.vmem [resolvable:$true] %s2047
          %2053 = dma.vmem_to_hbm [thread:$0]  %s2048, 256, %s14, [#allocation4], 128, 128, 8
        $region96: #{tpu_custom_call.1} parent=75 // pred_fallthru
          _
        // Predicated region
        $region97: #{tpu_custom_call.1} parent=75 // pred_check
          %p2054 = pneg %p397
        $region98: #{tpu_custom_call.1} parent=75 // pred_check_branch
          %2056 = sbr.rel (%p2054) target = $region100
        $region99: #{tpu_custom_call.1} parent=75 // pred_region
          %2057 = dma.done [#allocation4], 256
        $region100: #{tpu_custom_call.1} parent=75 // pred_fallthru
          _
      $region76: #{tpu_custom_call.1} parent=5 // pred_fallthru
        _
      %p2058 = scmp.le.s32.totalorder 2, %s25
      // Predicated region
      $region101: #{tpu_custom_call.1} parent=5 // pred_check
        %p2059 = pneg %p2058
      $region102: #{tpu_custom_call.1} parent=5 // pred_check_branch
        %2061 = sbr.rel (%p2059) target = $region104
      $region103: #{tpu_custom_call.1} parent=5 // pred_region
        %s2062 = ssub.s32 %s25, 2
      $region104: #{tpu_custom_call.1} parent=5 // pred_fallthru
        _
    $region6: #{tpu_custom_call.1} parent=1 // loop_footer
      %s29 = sadd.s32 1, %s25
    $region7: #{tpu_custom_call.1} parent=1 // loop_footer_branch
      %24 = sbr.rel target = $region3
    $region8: #{tpu_custom_call.1} parent=1 // loop_exit
      _
    %2063 = vsyncpa [#allocation3], 1
    %s2064 = scalar_lea.sflag [#allocation3], 1
    %2065 = vsyncpa %s2064, 1
    %2066 = vsyncpa [#allocation6], 1
    %s2067 = scalar_lea.sflag [#allocation6], 1
    %2068 = vsyncpa %s2067, 1
    %2069 = vsyncpa [#allocation4], 1
    %s2070 = scalar_lea.sflag [#allocation4], 1
    %2071 = vsyncpa %s2070, 1

</llo_original>
